<compile_context>
chip_gen: v7x
topology: tpu7x:2x2x1
jax: 0.10.0
libtpu: 0.0.40
codegen_flags: <defaults>
</compile_context>

<pallas_src>
import functools

import jax
import jax.numpy as jnp
from jax.experimental import pallas as pl
from jax.experimental.pallas import tpu as pltpu

EPS = 1e-5
LANE = 128
_VMEM_LIMIT = 32 * 1024 * 1024


def _round_up(x, m):
    return (x + m - 1) // m * m


def _pick_row_tile(p):
    for t in (512, 256, 128, 64, 32, 16, 8):
        if p % t == 0:
            return t
    return p


# ---------------------------------------------------------------------------
# Pallas kernels
# ---------------------------------------------------------------------------
def _conv3x3_stats_kernel(x_ref, sc_ref, sh_ref, w_ref, o_ref, st_ref,
                          *, hh, ww, apply_prelude):
    """One image per grid step.

    x_ref : (1, H, W, Cin_p)  raw input (bf16) or previous raw conv output (f32)
    sc_ref, sh_ref : (1, 1, Cin_p) f32 folded BN scale/shift of the *previous*
                     conv (ignored when apply_prelude=False)
    w_ref : (9*Cin_p, Cout_p) bf16 packed conv weights (taps folded into K)
    o_ref : (1, H, W, Cout_p) f32 raw (pre-BN) conv output
    st_ref: (1, 2, Cout_p)    f32 per-image [sum; sum-of-squares]
    """
    cin_p = x_ref.shape[-1]
    cout_p = o_ref.shape[-1]

    x = x_ref[0]                                        # (H, W, Cin_p)
    if apply_prelude:
        # previous layer's BN (folded to scale/shift) + ReLU, fused here.
        y = jnp.maximum(x.astype(jnp.float32) * sc_ref[...] + sh_ref[...], 0.0)
    else:
        y = x.astype(jnp.float32)

    # Build the 9 shifted taps in VMEM (no im2col in HBM).  roll + edge mask
    # reproduces the zero spatial padding of the 3x3 conv (padding is applied
    # *after* the BN+ReLU prologue, matching PyTorch's conv of the activation).
    row = jax.lax.broadcasted_iota(jnp.int32, (hh, ww, 1), 0)
    col = jax.lax.broadcasted_iota(jnp.int32, (hh, ww, 1), 1)
    taps = []
    for dy in (-1, 0, 1):
        for dx in (-1, 0, 1):
            t = y
            if dy:
                t = jnp.roll(t, -dy, axis=0)
            if dx:
                t = jnp.roll(t, -dx, axis=1)
            valid = ((row + dy >= 0) & (row + dy < hh) &
                     (col + dx >= 0) & (col + dx < ww))
            taps.append(jnp.where(valid, t, 0.0))
    patch = jnp.concatenate(taps, axis=-1)              # (H, W, 9*Cin_p)
    patch = patch.reshape(hh * ww, 9 * cin_p).astype(jnp.bfloat16)

    # Single MXU matmul: (H*W, 9*Cin_p) x (9*Cin_p, Cout_p), f32 accumulate.
    acc = jnp.dot(patch, w_ref[...], preferred_element_type=jnp.float32)

    o_ref[0] = acc.reshape(hh, ww, cout_p)
    s = jnp.sum(acc, axis=0, keepdims=True)             # (1, Cout_p)
    ss = jnp.sum(acc * acc, axis=0, keepdims=True)      # (1, Cout_p)
    st_ref[0] = jnp.concatenate([s, ss], axis=0)        # (2, Cout_p)


def _bn_residual_relu_kernel(h_ref, x_ref, sc_ref, sh_ref, o_ref):
    """Lane-dense (TILE_P, 128) tiles: relu(x + relu(h*scale + shift))."""
    y = jnp.maximum(h_ref[...] * sc_ref[...] + sh_ref[...], 0.0)
    o_ref[...] = jnp.maximum(x_ref[...] + y, 0.0)


# ---------------------------------------------------------------------------
# pallas_call wrappers
# ---------------------------------------------------------------------------
def _conv_bn_stats(x, scale, shift, w_packed, cout_p, *, apply_prelude):
    n, hh, ww, cin_p = x.shape
    kernel = functools.partial(_conv3x3_stats_kernel,
                               hh=hh, ww=ww, apply_prelude=apply_prelude)
    return pl.pallas_call(
        kernel,
        grid=(n,),
        in_specs=[
            pl.BlockSpec((1, hh, ww, cin_p), lambda i: (i, 0, 0, 0)),
            pl.BlockSpec((1, 1, cin_p), lambda i: (0, 0, 0)),
            pl.BlockSpec((1, 1, cin_p), lambda i: (0, 0, 0)),
            # packed weights stay resident in VMEM (constant block index).
            pl.BlockSpec((9 * cin_p, cout_p), lambda i: (0, 0)),
        ],
        out_specs=(
            pl.BlockSpec((1, hh, ww, cout_p), lambda i: (i, 0, 0, 0)),
            pl.BlockSpec((1, 2, cout_p), lambda i: (i, 0, 0)),
        ),
        out_shape=(
            jax.ShapeDtypeStruct((n, hh, ww, cout_p), jnp.float32),
            jax.ShapeDtypeStruct((n, 2, cout_p), jnp.float32),
        ),
        compiler_params=pltpu.CompilerParams(
            dimension_semantics=("parallel",),
            vmem_limit_bytes=_VMEM_LIMIT),
    )(x, scale, shift, w_packed)


def _pack_weights(w_oihw, cin_p, cout_p):
    """(Cout, Cin, 3, 3) -> (9*Cin_p, Cout_p) bf16, rows ordered (ky, kx, cin)."""
    co, ci, kh, kw = w_oihw.shape
    w = jnp.transpose(w_oihw.astype(jnp.float32), (2, 3, 1, 0))   # (3,3,Cin,Cout)
    w = jnp.pad(w, ((0, 0), (0, 0), (0, cin_p - ci), (0, cout_p - co)))
    return w.reshape(kh * kw * cin_p, cout_p).astype(jnp.bfloat16)


def _fold_bn(stats, gamma, beta, c, c_p, count):
    """Per-image [sum, sumsq] partials -> folded BN scale/shift
    (training mode: batch mean, biased variance)."""
    tot = jnp.sum(stats, axis=0)                        # (2, c_p)
    mean = tot[0] / count
    var = jnp.maximum(tot[1] / count - mean * mean, 0.0)
    g = jnp.pad(gamma.astype(jnp.float32), (0, c_p - c))
    b = jnp.pad(beta.astype(jnp.float32), (0, c_p - c))
    scale = g * jax.lax.rsqrt(var + EPS)
    shift = b - mean * scale
    return scale, shift


def residual_block_forward(x_nchw, params, same_shape=True):
    if not same_shape:
        # TODO(synk): stride-2 conv1 + 1x1 projection (conv3) branch not implemented.
        raise NotImplementedError("only same_shape=True is implemented")

    w1, g1, b1, w2, g2, b2 = params
    n, cin, hh, ww = x_nchw.shape
    cout = w1.shape[0]
    cin_p = _round_up(cin, LANE)
    cout_p = _round_up(cout, LANE)
    assert cin_p == cout_p, "identity shortcut requires cin == cout"
    count = n * hh * ww

    # NHWC, channels zero-padded to the 128-lane width (lane-dense tiles).
    x = jnp.transpose(x_nchw, (0, 2, 3, 1)).astype(jnp.float32)
    x_p = jnp.pad(x, ((0, 0), (0, 0), (0, 0), (0, cin_p - cin)))

    w1_p = _pack_weights(w1, cin_p, cout_p)
    w2_p = _pack_weights(w2, cout_p, cout_p)
    dummy = jnp.zeros((1, 1, cin_p), jnp.float32)

    # conv1 (raw, pre-BN) + per-image BN1 statistics.
    h1_raw, st1 = _conv_bn_stats(x_p.astype(jnp.bfloat16), dummy, dummy,
                                 w1_p, cout_p, apply_prelude=False)
    scale1, shift1 = _fold_bn(st1, g1, b1, cout, cout_p, count)

    # bn1 + relu fused into conv2's prologue; conv2 (raw) + BN2 statistics.
    h2_raw, st2 = _conv_bn_stats(h1_raw, scale1.reshape(1, 1, cout_p),
                                 shift1.reshape(1, 1, cout_p),
                                 w2_p, cout_p, apply_prelude=True)
    scale2, shift2 = _fold_bn(st2, g2, b2, cout, cout_p, count)

    # bn2 + relu + residual add + relu, tiled over flattened rows.
    p = n * hh * ww
    tp = _pick_row_tile(p)
    out_flat = pl.pallas_call(
        _bn_residual_relu_kernel,
        grid=(p // tp,),
        in_specs=[
            pl.BlockSpec((tp, cout_p), lambda i: (i, 0)),
            pl.BlockSpec((tp, cin_p), lambda i: (i, 0)),
            pl.BlockSpec((1, cout_p), lambda i: (0, 0)),
            pl.BlockSpec((1, cout_p), lambda i: (0, 0)),
        ],
        out_specs=pl.BlockSpec((tp, cout_p), lambda i: (i, 0)),
        out_shape=jax.ShapeDtypeStruct((p, cout_p), jnp.float32),
        compiler_params=pltpu.CompilerParams(
            dimension_semantics=("parallel",),
            vmem_limit_bytes=_VMEM_LIMIT),
    )(h2_raw.reshape(p, cout_p), x_p.reshape(p, cin_p),
      scale2.reshape(1, cout_p), shift2.reshape(1, cout_p))

    out = out_flat.reshape(n, hh, ww, cout_p)[..., :cout]
    return jnp.transpose(out, (0, 3, 1, 2))             # back to NCHW


# ---------------------------------------------------------------------------
# Pure-JAX reference (for correctness check)
# ---------------------------------------------------------------------------
def reference_forward(x, params):
    w1, g1, b1, w2, g2, b2 = params

    def conv3x3(x, w):
        return jax.lax.conv_general_dilated(
            x, w, window_strides=(1, 1), padding=((1, 1), (1, 1)),
            dimension_numbers=("NCHW", "OIHW", "NCHW"),
            precision=jax.lax.Precision.HIGHEST)

    def bn_relu(x, g, b):
        mean = jnp.mean(x, axis=(0, 2, 3), keepdims=True)
        var = jnp.mean((x - mean) ** 2, axis=(0, 2, 3), keepdims=True)
        y = (x - mean) * jax.lax.rsqrt(var + EPS)
        y = y * g.reshape(1, -1, 1, 1) + b.reshape(1, -1, 1, 1)
        return jnp.maximum(y, 0.0)

    out = bn_relu(conv3x3(x, w1), g1, b1)
    out = bn_relu(conv3x3(out, w2), g2, b2)
    return jnp.maximum(x + out, 0.0)


# ---------------------------------------------------------------------------
if __name__ == "__main__":
    key = jax.random.PRNGKey(0)
    kx, k1, k2 = jax.random.split(key, 3)

    N, C, H, W = 2, 4, 16, 16          # in_channel = out_channel = 4, same_shape
    x = jax.random.normal(kx, (N, C, H, W), jnp.float32)

    # deterministic synthetic parameters (conv3x3 weights OIHW, no bias; BN affine)
    w1 = 0.1 * jax.random.normal(k1, (C, C, 3, 3), jnp.float32)
    w2 = 0.1 * jax.random.normal(k2, (C, C, 3, 3), jnp.float32)
    g1 = jnp.ones((C,), jnp.float32)
    b1 = jnp.zeros((C,), jnp.float32)
    g2 = jnp.ones((C,), jnp.float32)
    b2 = jnp.zeros((C,), jnp.float32)
    params = (w1, g1, b1, w2, g2, b2)

    out = residual_block_forward(x, params, same_shape=True)
    out = jax.block_until_ready(out)

    ref = reference_forward(x, params)
    assert out.shape == (N, C, H, W)
    assert bool(jnp.allclose(out, ref, atol=5e-2, rtol=5e-2)), \
        float(jnp.max(jnp.abs(out - ref)))

    print("KERNEL_OK")
</pallas_src>

<mosaic_0001>
module attributes {stable_mosaic.version = 11 : i64} {
  func.func @_conv3x3_stats_kernel(%arg0: i32, %arg1: memref<1x16x16x128xbf16, #tpu.memory_space<vmem>>, %arg2: memref<1x1x128xf32, #tpu.memory_space<vmem>>, %arg3: memref<1x1x128xf32, #tpu.memory_space<vmem>>, %arg4: memref<1152x128xbf16, #tpu.memory_space<vmem>>, %arg5: memref<1x16x16x128xf32, #tpu.memory_space<vmem>>, %arg6: memref<1x2x128xf32, #tpu.memory_space<vmem>>) attributes {dimension_semantics = [#tpu.dimension_semantics<parallel>], iteration_bounds = array<i64: 2>, scalar_prefetch = 0 : i64, scratch_operands = 0 : i64, tpu.core_type = #tpu.core_type<tc>, window_params = [{transform_indices = @transform_0, window_bounds = array<i64: 1, 16, 16, 128>}, {pipeline_mode = #tpu.pipeline_mode<synchronous>, transform_indices = @transform_1, window_bounds = array<i64: 1, 1, 128>}, {pipeline_mode = #tpu.pipeline_mode<synchronous>, transform_indices = @transform_2, window_bounds = array<i64: 1, 1, 128>}, {pipeline_mode = #tpu.pipeline_mode<synchronous>, transform_indices = @transform_3, window_bounds = array<i64: 1152, 128>}, {transform_indices = @transform_4, window_bounds = array<i64: 1, 16, 16, 128>}, {transform_indices = @transform_5, window_bounds = array<i64: 1, 2, 128>}]} {
    %c0 = arith.constant 0 : index
    %c0_0 = arith.constant 0 : index
    %c0_1 = arith.constant 0 : index
    %c0_2 = arith.constant 0 : index
    %0 = vector.load %arg1[%c0, %c0_0, %c0_1, %c0_2] : memref<1x16x16x128xbf16, #tpu.memory_space<vmem>>, vector<1x16x16x128xbf16>
    %1 = vector.shape_cast %0 : vector<1x16x16x128xbf16> to vector<16x16x128xbf16>
    %2 = arith.extf %1 : vector<16x16x128xbf16> to vector<16x16x128xf32>
    %3 = tpu.iota {dimensions = array<i32: 0>} : vector<16x16x1xi32>
    %4 = tpu.iota {dimensions = array<i32: 1>} : vector<16x16x1xi32>
    %5 = vector.extract_strided_slice %2 {offsets = [15, 0, 0], sizes = [1, 16, 128], strides = [1, 1, 1]} : vector<16x16x128xf32> to vector<1x16x128xf32>
    %6 = vector.extract_strided_slice %2 {offsets = [0, 0, 0], sizes = [15, 16, 128], strides = [1, 1, 1]} : vector<16x16x128xf32> to vector<15x16x128xf32>
    %7 = tpu.concatenate %5, %6 in 0 : vector<1x16x128xf32>, vector<15x16x128xf32> -> vector<16x16x128xf32>
    %8 = vector.extract_strided_slice %7 {offsets = [0, 15, 0], sizes = [16, 1, 128], strides = [1, 1, 1]} : vector<16x16x128xf32> to vector<16x1x128xf32>
    %9 = vector.extract_strided_slice %7 {offsets = [0, 0, 0], sizes = [16, 15, 128], strides = [1, 1, 1]} : vector<16x16x128xf32> to vector<16x15x128xf32>
    %10 = tpu.concatenate %8, %9 in 1 : vector<16x1x128xf32>, vector<16x15x128xf32> -> vector<16x16x128xf32>
    %c-1_i32 = arith.constant -1 : i32
    %11 = vector.broadcast %c-1_i32 : i32 to vector<16x16x1xi32>
    %12 = arith.addi %3, %11 : vector<16x16x1xi32>
    %c0_i32 = arith.constant 0 : i32
    %13 = vector.broadcast %c0_i32 : i32 to vector<16x16x1xi32>
    %14 = arith.cmpi sge, %12, %13 : vector<16x16x1xi32>
    %c-1_i32_3 = arith.constant -1 : i32
    %15 = vector.broadcast %c-1_i32_3 : i32 to vector<16x16x1xi32>
    %16 = arith.addi %3, %15 : vector<16x16x1xi32>
    %c16_i32 = arith.constant 16 : i32
    %17 = vector.broadcast %c16_i32 : i32 to vector<16x16x1xi32>
    %18 = arith.cmpi slt, %16, %17 : vector<16x16x1xi32>
    %19 = arith.andi %14, %18 : vector<16x16x1xi1>
    %c-1_i32_4 = arith.constant -1 : i32
    %20 = vector.broadcast %c-1_i32_4 : i32 to vector<16x16x1xi32>
    %21 = arith.addi %4, %20 : vector<16x16x1xi32>
    %c0_i32_5 = arith.constant 0 : i32
    %22 = vector.broadcast %c0_i32_5 : i32 to vector<16x16x1xi32>
    %23 = arith.cmpi sge, %21, %22 : vector<16x16x1xi32>
    %24 = arith.andi %19, %23 : vector<16x16x1xi1>
    %c-1_i32_6 = arith.constant -1 : i32
    %25 = vector.broadcast %c-1_i32_6 : i32 to vector<16x16x1xi32>
    %26 = arith.addi %4, %25 : vector<16x16x1xi32>
    %c16_i32_7 = arith.constant 16 : i32
    %27 = vector.broadcast %c16_i32_7 : i32 to vector<16x16x1xi32>
    %28 = arith.cmpi slt, %26, %27 : vector<16x16x1xi32>
    %29 = arith.andi %24, %28 : vector<16x16x1xi1>
    %cst = arith.constant 0.000000e+00 : f32
    %30 = vector.shape_cast %29 : vector<16x16x1xi1> to vector<16x16x1xi1>
    %31 = vector.broadcast %30 : vector<16x16x1xi1> to vector<16x16x128xi1>
    %32 = vector.broadcast %cst : f32 to vector<16x16x128xf32>
    %33 = arith.select %31, %10, %32 : vector<16x16x128xi1>, vector<16x16x128xf32>
    %34 = vector.extract_strided_slice %2 {offsets = [15, 0, 0], sizes = [1, 16, 128], strides = [1, 1, 1]} : vector<16x16x128xf32> to vector<1x16x128xf32>
    %35 = vector.extract_strided_slice %2 {offsets = [0, 0, 0], sizes = [15, 16, 128], strides = [1, 1, 1]} : vector<16x16x128xf32> to vector<15x16x128xf32>
    %36 = tpu.concatenate %34, %35 in 0 : vector<1x16x128xf32>, vector<15x16x128xf32> -> vector<16x16x128xf32>
    %c-1_i32_8 = arith.constant -1 : i32
    %37 = vector.broadcast %c-1_i32_8 : i32 to vector<16x16x1xi32>
    %38 = arith.addi %3, %37 : vector<16x16x1xi32>
    %c0_i32_9 = arith.constant 0 : i32
    %39 = vector.broadcast %c0_i32_9 : i32 to vector<16x16x1xi32>
    %40 = arith.cmpi sge, %38, %39 : vector<16x16x1xi32>
    %c-1_i32_10 = arith.constant -1 : i32
    %41 = vector.broadcast %c-1_i32_10 : i32 to vector<16x16x1xi32>
    %42 = arith.addi %3, %41 : vector<16x16x1xi32>
    %c16_i32_11 = arith.constant 16 : i32
    %43 = vector.broadcast %c16_i32_11 : i32 to vector<16x16x1xi32>
    %44 = arith.cmpi slt, %42, %43 : vector<16x16x1xi32>
    %45 = arith.andi %40, %44 : vector<16x16x1xi1>
    %c0_i32_12 = arith.constant 0 : i32
    %46 = vector.broadcast %c0_i32_12 : i32 to vector<16x16x1xi32>
    %47 = arith.addi %4, %46 : vector<16x16x1xi32>
    %c0_i32_13 = arith.constant 0 : i32
    %48 = vector.broadcast %c0_i32_13 : i32 to vector<16x16x1xi32>
    %49 = arith.cmpi sge, %47, %48 : vector<16x16x1xi32>
    %50 = arith.andi %45, %49 : vector<16x16x1xi1>
    %c0_i32_14 = arith.constant 0 : i32
    %51 = vector.broadcast %c0_i32_14 : i32 to vector<16x16x1xi32>
    %52 = arith.addi %4, %51 : vector<16x16x1xi32>
    %c16_i32_15 = arith.constant 16 : i32
    %53 = vector.broadcast %c16_i32_15 : i32 to vector<16x16x1xi32>
    %54 = arith.cmpi slt, %52, %53 : vector<16x16x1xi32>
    %55 = arith.andi %50, %54 : vector<16x16x1xi1>
    %cst_16 = arith.constant 0.000000e+00 : f32
    %56 = vector.shape_cast %55 : vector<16x16x1xi1> to vector<16x16x1xi1>
    %57 = vector.broadcast %56 : vector<16x16x1xi1> to vector<16x16x128xi1>
    %58 = vector.broadcast %cst_16 : f32 to vector<16x16x128xf32>
    %59 = arith.select %57, %36, %58 : vector<16x16x128xi1>, vector<16x16x128xf32>
    %60 = vector.extract_strided_slice %2 {offsets = [15, 0, 0], sizes = [1, 16, 128], strides = [1, 1, 1]} : vector<16x16x128xf32> to vector<1x16x128xf32>
    %61 = vector.extract_strided_slice %2 {offsets = [0, 0, 0], sizes = [15, 16, 128], strides = [1, 1, 1]} : vector<16x16x128xf32> to vector<15x16x128xf32>
    %62 = tpu.concatenate %60, %61 in 0 : vector<1x16x128xf32>, vector<15x16x128xf32> -> vector<16x16x128xf32>
    %63 = vector.extract_strided_slice %62 {offsets = [0, 1, 0], sizes = [16, 15, 128], strides = [1, 1, 1]} : vector<16x16x128xf32> to vector<16x15x128xf32>
    %64 = vector.extract_strided_slice %62 {offsets = [0, 0, 0], sizes = [16, 1, 128], strides = [1, 1, 1]} : vector<16x16x128xf32> to vector<16x1x128xf32>
    %65 = tpu.concatenate %63, %64 in 1 : vector<16x15x128xf32>, vector<16x1x128xf32> -> vector<16x16x128xf32>
    %c-1_i32_17 = arith.constant -1 : i32
    %66 = vector.broadcast %c-1_i32_17 : i32 to vector<16x16x1xi32>
    %67 = arith.addi %3, %66 : vector<16x16x1xi32>
    %c0_i32_18 = arith.constant 0 : i32
    %68 = vector.broadcast %c0_i32_18 : i32 to vector<16x16x1xi32>
    %69 = arith.cmpi sge, %67, %68 : vector<16x16x1xi32>
    %c-1_i32_19 = arith.constant -1 : i32
    %70 = vector.broadcast %c-1_i32_19 : i32 to vector<16x16x1xi32>
    %71 = arith.addi %3, %70 : vector<16x16x1xi32>
    %c16_i32_20 = arith.constant 16 : i32
    %72 = vector.broadcast %c16_i32_20 : i32 to vector<16x16x1xi32>
    %73 = arith.cmpi slt, %71, %72 : vector<16x16x1xi32>
    %74 = arith.andi %69, %73 : vector<16x16x1xi1>
    %c1_i32 = arith.constant 1 : i32
    %75 = vector.broadcast %c1_i32 : i32 to vector<16x16x1xi32>
    %76 = arith.addi %4, %75 : vector<16x16x1xi32>
    %c0_i32_21 = arith.constant 0 : i32
    %77 = vector.broadcast %c0_i32_21 : i32 to vector<16x16x1xi32>
    %78 = arith.cmpi sge, %76, %77 : vector<16x16x1xi32>
    %79 = arith.andi %74, %78 : vector<16x16x1xi1>
    %c1_i32_22 = arith.constant 1 : i32
    %80 = vector.broadcast %c1_i32_22 : i32 to vector<16x16x1xi32>
    %81 = arith.addi %4, %80 : vector<16x16x1xi32>
    %c16_i32_23 = arith.constant 16 : i32
    %82 = vector.broadcast %c16_i32_23 : i32 to vector<16x16x1xi32>
    %83 = arith.cmpi slt, %81, %82 : vector<16x16x1xi32>
    %84 = arith.andi %79, %83 : vector<16x16x1xi1>
    %cst_24 = arith.constant 0.000000e+00 : f32
    %85 = vector.shape_cast %84 : vector<16x16x1xi1> to vector<16x16x1xi1>
    %86 = vector.broadcast %85 : vector<16x16x1xi1> to vector<16x16x128xi1>
    %87 = vector.broadcast %cst_24 : f32 to vector<16x16x128xf32>
    %88 = arith.select %86, %65, %87 : vector<16x16x128xi1>, vector<16x16x128xf32>
    %89 = vector.extract_strided_slice %2 {offsets = [0, 15, 0], sizes = [16, 1, 128], strides = [1, 1, 1]} : vector<16x16x128xf32> to vector<16x1x128xf32>
    %90 = vector.extract_strided_slice %2 {offsets = [0, 0, 0], sizes = [16, 15, 128], strides = [1, 1, 1]} : vector<16x16x128xf32> to vector<16x15x128xf32>
    %91 = tpu.concatenate %89, %90 in 1 : vector<16x1x128xf32>, vector<16x15x128xf32> -> vector<16x16x128xf32>
    %c0_i32_25 = arith.constant 0 : i32
    %92 = vector.broadcast %c0_i32_25 : i32 to vector<16x16x1xi32>
    %93 = arith.addi %3, %92 : vector<16x16x1xi32>
    %c0_i32_26 = arith.constant 0 : i32
    %94 = vector.broadcast %c0_i32_26 : i32 to vector<16x16x1xi32>
    %95 = arith.cmpi sge, %93, %94 : vector<16x16x1xi32>
    %c0_i32_27 = arith.constant 0 : i32
    %96 = vector.broadcast %c0_i32_27 : i32 to vector<16x16x1xi32>
    %97 = arith.addi %3, %96 : vector<16x16x1xi32>
    %c16_i32_28 = arith.constant 16 : i32
    %98 = vector.broadcast %c16_i32_28 : i32 to vector<16x16x1xi32>
    %99 = arith.cmpi slt, %97, %98 : vector<16x16x1xi32>
    %100 = arith.andi %95, %99 : vector<16x16x1xi1>
    %c-1_i32_29 = arith.constant -1 : i32
    %101 = vector.broadcast %c-1_i32_29 : i32 to vector<16x16x1xi32>
    %102 = arith.addi %4, %101 : vector<16x16x1xi32>
    %c0_i32_30 = arith.constant 0 : i32
    %103 = vector.broadcast %c0_i32_30 : i32 to vector<16x16x1xi32>
    %104 = arith.cmpi sge, %102, %103 : vector<16x16x1xi32>
    %105 = arith.andi %100, %104 : vector<16x16x1xi1>
    %c-1_i32_31 = arith.constant -1 : i32
    %106 = vector.broadcast %c-1_i32_31 : i32 to vector<16x16x1xi32>
    %107 = arith.addi %4, %106 : vector<16x16x1xi32>
    %c16_i32_32 = arith.constant 16 : i32
    %108 = vector.broadcast %c16_i32_32 : i32 to vector<16x16x1xi32>
    %109 = arith.cmpi slt, %107, %108 : vector<16x16x1xi32>
    %110 = arith.andi %105, %109 : vector<16x16x1xi1>
    %cst_33 = arith.constant 0.000000e+00 : f32
    %111 = vector.shape_cast %110 : vector<16x16x1xi1> to vector<16x16x1xi1>
    %112 = vector.broadcast %111 : vector<16x16x1xi1> to vector<16x16x128xi1>
    %113 = vector.broadcast %cst_33 : f32 to vector<16x16x128xf32>
    %114 = arith.select %112, %91, %113 : vector<16x16x128xi1>, vector<16x16x128xf32>
    %c0_i32_34 = arith.constant 0 : i32
    %115 = vector.broadcast %c0_i32_34 : i32 to vector<16x16x1xi32>
    %116 = arith.addi %3, %115 : vector<16x16x1xi32>
    %c0_i32_35 = arith.constant 0 : i32
    %117 = vector.broadcast %c0_i32_35 : i32 to vector<16x16x1xi32>
    %118 = arith.cmpi sge, %116, %117 : vector<16x16x1xi32>
    %c0_i32_36 = arith.constant 0 : i32
    %119 = vector.broadcast %c0_i32_36 : i32 to vector<16x16x1xi32>
    %120 = arith.addi %3, %119 : vector<16x16x1xi32>
    %c16_i32_37 = arith.constant 16 : i32
    %121 = vector.broadcast %c16_i32_37 : i32 to vector<16x16x1xi32>
    %122 = arith.cmpi slt, %120, %121 : vector<16x16x1xi32>
    %123 = arith.andi %118, %122 : vector<16x16x1xi1>
    %c0_i32_38 = arith.constant 0 : i32
    %124 = vector.broadcast %c0_i32_38 : i32 to vector<16x16x1xi32>
    %125 = arith.addi %4, %124 : vector<16x16x1xi32>
    %c0_i32_39 = arith.constant 0 : i32
    %126 = vector.broadcast %c0_i32_39 : i32 to vector<16x16x1xi32>
    %127 = arith.cmpi sge, %125, %126 : vector<16x16x1xi32>
    %128 = arith.andi %123, %127 : vector<16x16x1xi1>
    %c0_i32_40 = arith.constant 0 : i32
    %129 = vector.broadcast %c0_i32_40 : i32 to vector<16x16x1xi32>
    %130 = arith.addi %4, %129 : vector<16x16x1xi32>
    %c16_i32_41 = arith.constant 16 : i32
    %131 = vector.broadcast %c16_i32_41 : i32 to vector<16x16x1xi32>
    %132 = arith.cmpi slt, %130, %131 : vector<16x16x1xi32>
    %133 = arith.andi %128, %132 : vector<16x16x1xi1>
    %cst_42 = arith.constant 0.000000e+00 : f32
    %134 = vector.shape_cast %133 : vector<16x16x1xi1> to vector<16x16x1xi1>
    %135 = vector.broadcast %134 : vector<16x16x1xi1> to vector<16x16x128xi1>
    %136 = vector.broadcast %cst_42 : f32 to vector<16x16x128xf32>
    %137 = arith.select %135, %2, %136 : vector<16x16x128xi1>, vector<16x16x128xf32>
    %138 = vector.extract_strided_slice %2 {offsets = [0, 1, 0], sizes = [16, 15, 128], strides = [1, 1, 1]} : vector<16x16x128xf32> to vector<16x15x128xf32>
    %139 = vector.extract_strided_slice %2 {offsets = [0, 0, 0], sizes = [16, 1, 128], strides = [1, 1, 1]} : vector<16x16x128xf32> to vector<16x1x128xf32>
    %140 = tpu.concatenate %138, %139 in 1 : vector<16x15x128xf32>, vector<16x1x128xf32> -> vector<16x16x128xf32>
    %c0_i32_43 = arith.constant 0 : i32
    %141 = vector.broadcast %c0_i32_43 : i32 to vector<16x16x1xi32>
    %142 = arith.addi %3, %141 : vector<16x16x1xi32>
    %c0_i32_44 = arith.constant 0 : i32
    %143 = vector.broadcast %c0_i32_44 : i32 to vector<16x16x1xi32>
    %144 = arith.cmpi sge, %142, %143 : vector<16x16x1xi32>
    %c0_i32_45 = arith.constant 0 : i32
    %145 = vector.broadcast %c0_i32_45 : i32 to vector<16x16x1xi32>
    %146 = arith.addi %3, %145 : vector<16x16x1xi32>
    %c16_i32_46 = arith.constant 16 : i32
    %147 = vector.broadcast %c16_i32_46 : i32 to vector<16x16x1xi32>
    %148 = arith.cmpi slt, %146, %147 : vector<16x16x1xi32>
    %149 = arith.andi %144, %148 : vector<16x16x1xi1>
    %c1_i32_47 = arith.constant 1 : i32
    %150 = vector.broadcast %c1_i32_47 : i32 to vector<16x16x1xi32>
    %151 = arith.addi %4, %150 : vector<16x16x1xi32>
    %c0_i32_48 = arith.constant 0 : i32
    %152 = vector.broadcast %c0_i32_48 : i32 to vector<16x16x1xi32>
    %153 = arith.cmpi sge, %151, %152 : vector<16x16x1xi32>
    %154 = arith.andi %149, %153 : vector<16x16x1xi1>
    %c1_i32_49 = arith.constant 1 : i32
    %155 = vector.broadcast %c1_i32_49 : i32 to vector<16x16x1xi32>
    %156 = arith.addi %4, %155 : vector<16x16x1xi32>
    %c16_i32_50 = arith.constant 16 : i32
    %157 = vector.broadcast %c16_i32_50 : i32 to vector<16x16x1xi32>
    %158 = arith.cmpi slt, %156, %157 : vector<16x16x1xi32>
    %159 = arith.andi %154, %158 : vector<16x16x1xi1>
    %cst_51 = arith.constant 0.000000e+00 : f32
    %160 = vector.shape_cast %159 : vector<16x16x1xi1> to vector<16x16x1xi1>
    %161 = vector.broadcast %160 : vector<16x16x1xi1> to vector<16x16x128xi1>
    %162 = vector.broadcast %cst_51 : f32 to vector<16x16x128xf32>
    %163 = arith.select %161, %140, %162 : vector<16x16x128xi1>, vector<16x16x128xf32>
    %164 = vector.extract_strided_slice %2 {offsets = [1, 0, 0], sizes = [15, 16, 128], strides = [1, 1, 1]} : vector<16x16x128xf32> to vector<15x16x128xf32>
    %165 = vector.extract_strided_slice %2 {offsets = [0, 0, 0], sizes = [1, 16, 128], strides = [1, 1, 1]} : vector<16x16x128xf32> to vector<1x16x128xf32>
    %166 = tpu.concatenate %164, %165 in 0 : vector<15x16x128xf32>, vector<1x16x128xf32> -> vector<16x16x128xf32>
    %167 = vector.extract_strided_slice %166 {offsets = [0, 15, 0], sizes = [16, 1, 128], strides = [1, 1, 1]} : vector<16x16x128xf32> to vector<16x1x128xf32>
    %168 = vector.extract_strided_slice %166 {offsets = [0, 0, 0], sizes = [16, 15, 128], strides = [1, 1, 1]} : vector<16x16x128xf32> to vector<16x15x128xf32>
    %169 = tpu.concatenate %167, %168 in 1 : vector<16x1x128xf32>, vector<16x15x128xf32> -> vector<16x16x128xf32>
    %c1_i32_52 = arith.constant 1 : i32
    %170 = vector.broadcast %c1_i32_52 : i32 to vector<16x16x1xi32>
    %171 = arith.addi %3, %170 : vector<16x16x1xi32>
    %c0_i32_53 = arith.constant 0 : i32
    %172 = vector.broadcast %c0_i32_53 : i32 to vector<16x16x1xi32>
    %173 = arith.cmpi sge, %171, %172 : vector<16x16x1xi32>
    %c1_i32_54 = arith.constant 1 : i32
    %174 = vector.broadcast %c1_i32_54 : i32 to vector<16x16x1xi32>
    %175 = arith.addi %3, %174 : vector<16x16x1xi32>
    %c16_i32_55 = arith.constant 16 : i32
    %176 = vector.broadcast %c16_i32_55 : i32 to vector<16x16x1xi32>
    %177 = arith.cmpi slt, %175, %176 : vector<16x16x1xi32>
    %178 = arith.andi %173, %177 : vector<16x16x1xi1>
    %c-1_i32_56 = arith.constant -1 : i32
    %179 = vector.broadcast %c-1_i32_56 : i32 to vector<16x16x1xi32>
    %180 = arith.addi %4, %179 : vector<16x16x1xi32>
    %c0_i32_57 = arith.constant 0 : i32
    %181 = vector.broadcast %c0_i32_57 : i32 to vector<16x16x1xi32>
    %182 = arith.cmpi sge, %180, %181 : vector<16x16x1xi32>
    %183 = arith.andi %178, %182 : vector<16x16x1xi1>
    %c-1_i32_58 = arith.constant -1 : i32
    %184 = vector.broadcast %c-1_i32_58 : i32 to vector<16x16x1xi32>
    %185 = arith.addi %4, %184 : vector<16x16x1xi32>
    %c16_i32_59 = arith.constant 16 : i32
    %186 = vector.broadcast %c16_i32_59 : i32 to vector<16x16x1xi32>
    %187 = arith.cmpi slt, %185, %186 : vector<16x16x1xi32>
    %188 = arith.andi %183, %187 : vector<16x16x1xi1>
    %cst_60 = arith.constant 0.000000e+00 : f32
    %189 = vector.shape_cast %188 : vector<16x16x1xi1> to vector<16x16x1xi1>
    %190 = vector.broadcast %189 : vector<16x16x1xi1> to vector<16x16x128xi1>
    %191 = vector.broadcast %cst_60 : f32 to vector<16x16x128xf32>
    %192 = arith.select %190, %169, %191 : vector<16x16x128xi1>, vector<16x16x128xf32>
    %193 = vector.extract_strided_slice %2 {offsets = [1, 0, 0], sizes = [15, 16, 128], strides = [1, 1, 1]} : vector<16x16x128xf32> to vector<15x16x128xf32>
    %194 = vector.extract_strided_slice %2 {offsets = [0, 0, 0], sizes = [1, 16, 128], strides = [1, 1, 1]} : vector<16x16x128xf32> to vector<1x16x128xf32>
    %195 = tpu.concatenate %193, %194 in 0 : vector<15x16x128xf32>, vector<1x16x128xf32> -> vector<16x16x128xf32>
    %c1_i32_61 = arith.constant 1 : i32
    %196 = vector.broadcast %c1_i32_61 : i32 to vector<16x16x1xi32>
    %197 = arith.addi %3, %196 : vector<16x16x1xi32>
    %c0_i32_62 = arith.constant 0 : i32
    %198 = vector.broadcast %c0_i32_62 : i32 to vector<16x16x1xi32>
    %199 = arith.cmpi sge, %197, %198 : vector<16x16x1xi32>
    %c1_i32_63 = arith.constant 1 : i32
    %200 = vector.broadcast %c1_i32_63 : i32 to vector<16x16x1xi32>
    %201 = arith.addi %3, %200 : vector<16x16x1xi32>
    %c16_i32_64 = arith.constant 16 : i32
    %202 = vector.broadcast %c16_i32_64 : i32 to vector<16x16x1xi32>
    %203 = arith.cmpi slt, %201, %202 : vector<16x16x1xi32>
    %204 = arith.andi %199, %203 : vector<16x16x1xi1>
    %c0_i32_65 = arith.constant 0 : i32
    %205 = vector.broadcast %c0_i32_65 : i32 to vector<16x16x1xi32>
    %206 = arith.addi %4, %205 : vector<16x16x1xi32>
    %c0_i32_66 = arith.constant 0 : i32
    %207 = vector.broadcast %c0_i32_66 : i32 to vector<16x16x1xi32>
    %208 = arith.cmpi sge, %206, %207 : vector<16x16x1xi32>
    %209 = arith.andi %204, %208 : vector<16x16x1xi1>
    %c0_i32_67 = arith.constant 0 : i32
    %210 = vector.broadcast %c0_i32_67 : i32 to vector<16x16x1xi32>
    %211 = arith.addi %4, %210 : vector<16x16x1xi32>
    %c16_i32_68 = arith.constant 16 : i32
    %212 = vector.broadcast %c16_i32_68 : i32 to vector<16x16x1xi32>
    %213 = arith.cmpi slt, %211, %212 : vector<16x16x1xi32>
    %214 = arith.andi %209, %213 : vector<16x16x1xi1>
    %cst_69 = arith.constant 0.000000e+00 : f32
    %215 = vector.shape_cast %214 : vector<16x16x1xi1> to vector<16x16x1xi1>
    %216 = vector.broadcast %215 : vector<16x16x1xi1> to vector<16x16x128xi1>
    %217 = vector.broadcast %cst_69 : f32 to vector<16x16x128xf32>
    %218 = arith.select %216, %195, %217 : vector<16x16x128xi1>, vector<16x16x128xf32>
    %219 = vector.extract_strided_slice %2 {offsets = [1, 0, 0], sizes = [15, 16, 128], strides = [1, 1, 1]} : vector<16x16x128xf32> to vector<15x16x128xf32>
    %220 = vector.extract_strided_slice %2 {offsets = [0, 0, 0], sizes = [1, 16, 128], strides = [1, 1, 1]} : vector<16x16x128xf32> to vector<1x16x128xf32>
    %221 = tpu.concatenate %219, %220 in 0 : vector<15x16x128xf32>, vector<1x16x128xf32> -> vector<16x16x128xf32>
    %222 = vector.extract_strided_slice %221 {offsets = [0, 1, 0], sizes = [16, 15, 128], strides = [1, 1, 1]} : vector<16x16x128xf32> to vector<16x15x128xf32>
    %223 = vector.extract_strided_slice %221 {offsets = [0, 0, 0], sizes = [16, 1, 128], strides = [1, 1, 1]} : vector<16x16x128xf32> to vector<16x1x128xf32>
    %224 = tpu.concatenate %222, %223 in 1 : vector<16x15x128xf32>, vector<16x1x128xf32> -> vector<16x16x128xf32>
    %c1_i32_70 = arith.constant 1 : i32
    %225 = vector.broadcast %c1_i32_70 : i32 to vector<16x16x1xi32>
    %226 = arith.addi %3, %225 : vector<16x16x1xi32>
    %c0_i32_71 = arith.constant 0 : i32
    %227 = vector.broadcast %c0_i32_71 : i32 to vector<16x16x1xi32>
    %228 = arith.cmpi sge, %226, %227 : vector<16x16x1xi32>
    %c1_i32_72 = arith.constant 1 : i32
    %229 = vector.broadcast %c1_i32_72 : i32 to vector<16x16x1xi32>
    %230 = arith.addi %3, %229 : vector<16x16x1xi32>
    %c16_i32_73 = arith.constant 16 : i32
    %231 = vector.broadcast %c16_i32_73 : i32 to vector<16x16x1xi32>
    %232 = arith.cmpi slt, %230, %231 : vector<16x16x1xi32>
    %233 = arith.andi %228, %232 : vector<16x16x1xi1>
    %c1_i32_74 = arith.constant 1 : i32
    %234 = vector.broadcast %c1_i32_74 : i32 to vector<16x16x1xi32>
    %235 = arith.addi %4, %234 : vector<16x16x1xi32>
    %c0_i32_75 = arith.constant 0 : i32
    %236 = vector.broadcast %c0_i32_75 : i32 to vector<16x16x1xi32>
    %237 = arith.cmpi sge, %235, %236 : vector<16x16x1xi32>
    %238 = arith.andi %233, %237 : vector<16x16x1xi1>
    %c1_i32_76 = arith.constant 1 : i32
    %239 = vector.broadcast %c1_i32_76 : i32 to vector<16x16x1xi32>
    %240 = arith.addi %4, %239 : vector<16x16x1xi32>
    %c16_i32_77 = arith.constant 16 : i32
    %241 = vector.broadcast %c16_i32_77 : i32 to vector<16x16x1xi32>
    %242 = arith.cmpi slt, %240, %241 : vector<16x16x1xi32>
    %243 = arith.andi %238, %242 : vector<16x16x1xi1>
    %cst_78 = arith.constant 0.000000e+00 : f32
    %244 = vector.shape_cast %243 : vector<16x16x1xi1> to vector<16x16x1xi1>
    %245 = vector.broadcast %244 : vector<16x16x1xi1> to vector<16x16x128xi1>
    %246 = vector.broadcast %cst_78 : f32 to vector<16x16x128xf32>
    %247 = arith.select %245, %224, %246 : vector<16x16x128xi1>, vector<16x16x128xf32>
    %248 = tpu.concatenate %33, %59, %88, %114, %137, %163, %192, %218, %247 in 2 : vector<16x16x128xf32>, vector<16x16x128xf32>, vector<16x16x128xf32>, vector<16x16x128xf32>, vector<16x16x128xf32>, vector<16x16x128xf32>, vector<16x16x128xf32>, vector<16x16x128xf32>, vector<16x16x128xf32> -> vector<16x16x1152xf32>
    %249 = vector.shape_cast %248 : vector<16x16x1152xf32> to vector<256x1152xf32>
    %250 = arith.truncf %249 : vector<256x1152xf32> to vector<256x1152xbf16>
    %c0_79 = arith.constant 0 : index
    %c0_80 = arith.constant 0 : index
    %251 = vector.load %arg4[%c0_79, %c0_80] : memref<1152x128xbf16, #tpu.memory_space<vmem>>, vector<1152x128xbf16>
    %cst_81 = arith.constant dense<0.000000e+00> : vector<256x128xf32>
    %252 = tpu.matmul %250, %251, %cst_81 {dimension_numbers = #tpu.dot_dimension_numbers<[1], [0], [0], [1], [0, 0, 1, 1], [], []>} : vector<256x1152xbf16>, vector<1152x128xbf16>, vector<256x128xf32> -> vector<256x128xf32>
    %253 = vector.shape_cast %252 : vector<256x128xf32> to vector<16x16x128xf32>
    %c0_82 = arith.constant 0 : index
    %c0_83 = arith.constant 0 : index
    %c0_84 = arith.constant 0 : index
    %c0_85 = arith.constant 0 : index
    %254 = vector.load %arg5[%c0_82, %c0_83, %c0_84, %c0_85] : memref<1x16x16x128xf32, #tpu.memory_space<vmem>>, vector<1x16x16x128xf32>
    %255 = vector.shape_cast %254 : vector<1x16x16x128xf32> to vector<16x16x128xf32>
    %256 = vector.shape_cast %253 : vector<16x16x128xf32> to vector<1x16x16x128xf32>
    tpu.vector_store %arg5[%c0_82, %c0_83, %c0_84, %c0_85], %256 {strides = array<i32>} : memref<1x16x16x128xf32, #tpu.memory_space<vmem>>, vector<1x16x16x128xf32>,
    %cst_86 = arith.constant dense<0.000000e+00> : vector<128xf32>
    %257 = vector.multi_reduction <add>, %252, %cst_86 [0] : vector<256x128xf32> to vector<128xf32>
    %258 = vector.shape_cast %257 : vector<128xf32> to vector<1x128xf32>
    %259 = arith.mulf %252, %252 : vector<256x128xf32>
    %cst_87 = arith.constant dense<0.000000e+00> : vector<128xf32>
    %260 = vector.multi_reduction <add>, %259, %cst_87 [0] : vector<256x128xf32> to vector<128xf32>
    %261 = vector.shape_cast %260 : vector<128xf32> to vector<1x128xf32>
    %262 = tpu.concatenate %258, %261 in 0 : vector<1x128xf32>, vector<1x128xf32> -> vector<2x128xf32>
    %c0_88 = arith.constant 0 : index
    %c0_89 = arith.constant 0 : index
    %c0_90 = arith.constant 0 : index
    %263 = vector.load %arg6[%c0_88, %c0_89, %c0_90] : memref<1x2x128xf32, #tpu.memory_space<vmem>>, vector<1x2x128xf32>
    %264 = vector.shape_cast %263 : vector<1x2x128xf32> to vector<2x128xf32>
    %265 = vector.shape_cast %262 : vector<2x128xf32> to vector<1x2x128xf32>
    tpu.vector_store %arg6[%c0_88, %c0_89, %c0_90], %265 {strides = array<i32>} : memref<1x2x128xf32, #tpu.memory_space<vmem>>, vector<1x2x128xf32>,
    return
  }
  func.func @transform_0(%arg0: i32) -> (i32, i32, i32, i32) {
    %c0_i32 = arith.constant 0 : i32
    %c0_i32_0 = arith.constant 0 : i32
    %c0_i32_1 = arith.constant 0 : i32
    %c0_i32_2 = arith.constant 0 : i32
    return %arg0, %c0_i32, %c0_i32_0, %c0_i32_1 : i32, i32, i32, i32
  }
  func.func @transform_1(%arg0: i32) -> (i32, i32, i32) {
    %c0_i32 = arith.constant 0 : i32
    %c0_i32_0 = arith.constant 0 : i32
    %c0_i32_1 = arith.constant 0 : i32
    %c0_i32_2 = arith.constant 0 : i32
    return %c0_i32, %c0_i32_0, %c0_i32_1 : i32, i32, i32
  }
  func.func @transform_2(%arg0: i32) -> (i32, i32, i32) {
    %c0_i32 = arith.constant 0 : i32
    %c0_i32_0 = arith.constant 0 : i32
    %c0_i32_1 = arith.constant 0 : i32
    %c0_i32_2 = arith.constant 0 : i32
    return %c0_i32, %c0_i32_0, %c0_i32_1 : i32, i32, i32
  }
  func.func @transform_3(%arg0: i32) -> (i32, i32) {
    %c0_i32 = arith.constant 0 : i32
    %c0_i32_0 = arith.constant 0 : i32
    %c0_i32_1 = arith.constant 0 : i32
    return %c0_i32, %c0_i32_0 : i32, i32
  }
  func.func @transform_4(%arg0: i32) -> (i32, i32, i32, i32) {
    %c0_i32 = arith.constant 0 : i32
    %c0_i32_0 = arith.constant 0 : i32
    %c0_i32_1 = arith.constant 0 : i32
    %c0_i32_2 = arith.constant 0 : i32
    return %arg0, %c0_i32, %c0_i32_0, %c0_i32_1 : i32, i32, i32, i32
  }
  func.func @transform_5(%arg0: i32) -> (i32, i32, i32) {
    %c0_i32 = arith.constant 0 : i32
    %c0_i32_0 = arith.constant 0 : i32
    %c0_i32_1 = arith.constant 0 : i32
    return %arg0, %c0_i32, %c0_i32_0 : i32, i32, i32
  }
}

</mosaic_0001>

<llo_original>
// kernel: tpu_custom_call.1
$region0: #{tpu_custom_call.1}
  #allocation0 [shape = 'u32[]', space=smem, size = 0x4, offset = 0x4, fixed_abs, tag = 'smem constant byte address 0x4 - core index']
  #allocation1 [shape = 'u32[144,128]{1,0:T(1,128)}', space=vmem, size = 0x12000, scoped, tag = 'internal scratch']
  %s0 = inlined_call_operand.hbm [shape: bf16[2,16,16,128], index: 0, kind: input, shape index: {}]
  %s1 = inlined_call_operand.vmem [shape: f32[1,1,128], index: 1, kind: input, shape index: {}]
  %s2 = inlined_call_operand.vmem [shape: f32[1,1,128], index: 2, kind: input, shape index: {}]
  %s3 = inlined_call_operand.hbm [shape: bf16[1152,128], index: 3, kind: input, shape index: {}]
  %s4 = inlined_call_operand.hbm [shape: f32[2,16,16,128], index: 4, kind: output, shape index: {0}]
  %s5 = inlined_call_operand.hbm [shape: f32[2,2,128], index: 5, kind: output, shape index: {1}]
  %6 = xla_tuple %s4, %s5
  %s7 = sld [smem:[#allocation0]]
  $region65: #{tpu_custom_call.1} parent=0
    _
  %s9 = ssub.s32 1, %s7
  %s10 = scalar_select 0, %s9, %s7
  $region1: #{tpu_custom_call.1} parent=0
    #allocation2 [shape = 'u8[131072]{0}', space=vmem, size = 0x20000, scoped, tag = 'input window, operand 0']
    #allocation3 [shape = 's32[2]{0}', space=sflag, size = 0x8, scoped, tag = 'scoped memory for tpu_custom_call.1']
    #allocation4 [shape = 's32[2]{0}', space=sflag, size = 0x8, scoped, tag = 'scoped memory for tpu_custom_call.1']
    #allocation5 [shape = 'u8[294912]{0}', space=vmem, size = 0x48000, scoped, tag = 'input window, operand 3, single buffered']
    #allocation6 [shape = 's32[1]{0}', space=sflag, size = 0x4, scoped, tag = 'scoped memory for tpu_custom_call.1']
    #allocation7 [shape = 'u8[262144]{0}', space=vmem, size = 0x40000, scoped, tag = 'output window, operand 0']
    #allocation8 [shape = 'u8[2048]{0}', space=vmem, size = 0x800, scoped, tag = 'output window, operand 1']
    #allocation9 [shape = 's32[2]{0}', space=sflag, size = 0x8, scoped, tag = 'scoped memory for tpu_custom_call.1']
    %11 = vsyncpa [#allocation3], 0
    %s12 = scalar_lea.sflag [#allocation3], 1
    %13 = vsyncpa %s12, 0
    %14 = vsyncpa [#allocation6], 0
    %15 = vsyncpa [#allocation4], 0
    %s16 = scalar_lea.sflag [#allocation4], 1
    %17 = vsyncpa %s16, 0
    %18 = vsyncpa [#allocation9], 0
    %s19 = scalar_lea.sflag [#allocation9], 1
    %20 = vsyncpa %s19, 0
    loop: start=0, step=1, limit=4
    $region2: #{tpu_custom_call.1} parent=1 // loop_pre_header
      _
    $region3: #{tpu_custom_call.1} parent=1 // loop_header
      %s22 = sphi 0, %s26
      %p23 = scmp.ge.s32.totalorder %s22, 4
      %s32 = sphi 0, %s34
      %s35 = sphi 0, %s32
      %s36 = sphi 0, %s35
      %s52 = sphi 0, %s36
      %s56 = sphi 0, %s56
      %s58 = sphi 0, %s56
      %s59 = sphi 0, %s58
      %s73 = sphi 0, %s59
      %s77 = sphi 0, %s77
      %s79 = sphi 0, %s77
      %s80 = sphi 0, %s79
      %s94 = sphi 0, %s80
      %s98 = sphi 0, %s98
      %s100 = sphi 0, %s98
      %s101 = sphi 0, %s100
      %s115 = sphi 0, %s101
      %s121 = sphi 0, %s123
      %s124 = sphi 0, %s121
      %s125 = sphi 0, %s124
      %s141 = sphi 0, %s125
      %s147 = sphi 0, %s149
      %s150 = sphi 0, %s147
      %s151 = sphi 0, %s150
      %s167 = sphi 0, %s151
    $region4: #{tpu_custom_call.1} parent=1 // loop_header_branch
      %25 = sbr.rel (%p23) target = $region8
    $region5: #{tpu_custom_call.1} parent=1 // loop_body
      %s27 = ssub.s32 %s22, 1
      %s28 = ssub.s32 %s22, 2
      %s29 = sadd.s32 %s22, 1
      %s30 = ssub.s32 %s22, %s29
      %p31 = scmp.eq.s32.totalorder %s30, 0
      %s33 = sadd.s32 %s32, 1
      %s34 = scalar_select %p31, %s32, %s33
      %p37 = pneg %p31
      %p38 = scmp.eq.s32.totalorder %s22, 1
      %p39 = por %p37, %p38
      %p40 = scmp.ne.s32.totalorder %s32, %s35
      %p41 = scmp.eq.s32.totalorder %s22, 0
      %p42 = por %p40, %p41
      %p43 = scmp.ne.s32.totalorder %s32, %s35
      %p44 = scmp.eq.s32.totalorder %s27, 1
      %p45 = por %p43, %p44
      %p46 = scmp.ne.s32.totalorder %s35, %s36
      %p47 = scmp.eq.s32.totalorder %s27, 0
      %p48 = por %p46, %p47
      %p49 = scmp.ne.s32.totalorder %s35, %s36
      %p50 = scmp.eq.s32.totalorder %s28, 1
      %p51 = por %p49, %p50
      %p53 = scmp.ne.s32.totalorder %s36, %s52
      %p54 = scmp.eq.s32.totalorder %s28, 0
      %p55 = por %p53, %p54
      %s57 = sadd.s32 %s56, 1
      %p60 = scmp.eq.s32.totalorder %s22, 1
      %p61 = scmp.ne.s32.totalorder %s56, %s58
      %p62 = scmp.eq.s32.totalorder %s22, 0
      %p63 = por %p61, %p62
      %p64 = scmp.ne.s32.totalorder %s56, %s58
      %p65 = scmp.eq.s32.totalorder %s27, 1
      %p66 = por %p64, %p65
      %p67 = scmp.ne.s32.totalorder %s58, %s59
      %p68 = scmp.eq.s32.totalorder %s27, 0
      %p69 = por %p67, %p68
      %p70 = scmp.ne.s32.totalorder %s58, %s59
      %p71 = scmp.eq.s32.totalorder %s28, 1
      %p72 = por %p70, %p71
      %p74 = scmp.ne.s32.totalorder %s59, %s73
      %p75 = scmp.eq.s32.totalorder %s28, 0
      %p76 = por %p74, %p75
      %s78 = sadd.s32 %s77, 1
      %p81 = scmp.eq.s32.totalorder %s22, 1
      %p82 = scmp.ne.s32.totalorder %s77, %s79
      %p83 = scmp.eq.s32.totalorder %s22, 0
      %p84 = por %p82, %p83
      %p85 = scmp.ne.s32.totalorder %s77, %s79
      %p86 = scmp.eq.s32.totalorder %s27, 1
      %p87 = por %p85, %p86
      %p88 = scmp.ne.s32.totalorder %s79, %s80
      %p89 = scmp.eq.s32.totalorder %s27, 0
      %p90 = por %p88, %p89
      %p91 = scmp.ne.s32.totalorder %s79, %s80
      %p92 = scmp.eq.s32.totalorder %s28, 1
      %p93 = por %p91, %p92
      %p95 = scmp.ne.s32.totalorder %s80, %s94
      %p96 = scmp.eq.s32.totalorder %s28, 0
      %p97 = por %p95, %p96
      %s99 = sadd.s32 %s98, 1
      %p102 = scmp.eq.s32.totalorder %s22, 1
      %p103 = scmp.ne.s32.totalorder %s98, %s100
      %p104 = scmp.eq.s32.totalorder %s22, 0
      %p105 = por %p103, %p104
      %p106 = scmp.ne.s32.totalorder %s98, %s100
      %p107 = scmp.eq.s32.totalorder %s27, 1
      %p108 = por %p106, %p107
      %p109 = scmp.ne.s32.totalorder %s100, %s101
      %p110 = scmp.eq.s32.totalorder %s27, 0
      %p111 = por %p109, %p110
      %p112 = scmp.ne.s32.totalorder %s100, %s101
      %p113 = scmp.eq.s32.totalorder %s28, 1
      %p114 = por %p112, %p113
      %p116 = scmp.ne.s32.totalorder %s101, %s115
      %p117 = scmp.eq.s32.totalorder %s28, 0
      %p118 = por %p116, %p117
      %s119 = ssub.s32 %s22, %s29
      %p120 = scmp.eq.s32.totalorder %s119, 0
      %s122 = sadd.s32 %s121, 1
      %s123 = scalar_select %p120, %s121, %s122
      %p126 = pneg %p120
      %p127 = scmp.eq.s32.totalorder %s22, 1
      %p128 = por %p126, %p127
      %p129 = scmp.ne.s32.totalorder %s121, %s124
      %p130 = scmp.eq.s32.totalorder %s22, 0
      %p131 = por %p129, %p130
      %p132 = scmp.ne.s32.totalorder %s121, %s124
      %p133 = scmp.eq.s32.totalorder %s27, 1
      %p134 = por %p132, %p133
      %p135 = scmp.ne.s32.totalorder %s124, %s125
      %p136 = scmp.eq.s32.totalorder %s27, 0
      %p137 = por %p135, %p136
      %p138 = scmp.ne.s32.totalorder %s124, %s125
      %p139 = scmp.eq.s32.totalorder %s28, 1
      %p140 = por %p138, %p139
      %p142 = scmp.ne.s32.totalorder %s125, %s141
      %p143 = scmp.eq.s32.totalorder %s28, 0
      %p144 = por %p142, %p143
      %s145 = ssub.s32 %s22, %s29
      %p146 = scmp.eq.s32.totalorder %s145, 0
      %s148 = sadd.s32 %s147, 1
      %s149 = scalar_select %p146, %s147, %s148
      %p152 = pneg %p146
      %p153 = scmp.eq.s32.totalorder %s22, 1
      %p154 = por %p152, %p153
      %p155 = scmp.ne.s32.totalorder %s147, %s150
      %p156 = scmp.eq.s32.totalorder %s22, 0
      %p157 = por %p155, %p156
      %p158 = scmp.ne.s32.totalorder %s147, %s150
      %p159 = scmp.eq.s32.totalorder %s27, 1
      %p160 = por %p158, %p159
      %p161 = scmp.ne.s32.totalorder %s150, %s151
      %p162 = scmp.eq.s32.totalorder %s27, 0
      %p163 = por %p161, %p162
      %p164 = scmp.ne.s32.totalorder %s150, %s151
      %p165 = scmp.eq.s32.totalorder %s28, 1
      %p166 = por %p164, %p165
      %p168 = scmp.ne.s32.totalorder %s151, %s167
      %p169 = scmp.eq.s32.totalorder %s28, 0
      %p170 = por %p168, %p169
      %p171 = scmp.le.s32.totalorder 1, %s22
      %p172 = scmp.lt.s32.totalorder %s22, 3
      %p173 = pnand %p171, %p172
      %p174 = pneg %p173
      // Predicated region
      $region9: #{tpu_custom_call.1} parent=5 // pred_check
        _
      $region10: #{tpu_custom_call.1} parent=5 // pred_check_branch
        %176 = sbr.rel (%p173) target = $region12
      $region11: #{tpu_custom_call.1} parent=5 // pred_region
        %s177 = ssub.s32 %s22, 1
        // Predicated region
        $region13: #{tpu_custom_call.1} parent=11 // pred_check
          %p178 = pneg %p69
        $region14: #{tpu_custom_call.1} parent=11 // pred_check_branch
          %180 = sbr.rel (%p178) target = $region16
        $region15: #{tpu_custom_call.1} parent=11 // pred_region
          _
        $region16: #{tpu_custom_call.1} parent=11 // pred_fallthru
          _
        // Predicated region
        $region17: #{tpu_custom_call.1} parent=11 // pred_check
          %p181 = pneg %p90
        $region18: #{tpu_custom_call.1} parent=11 // pred_check_branch
          %183 = sbr.rel (%p181) target = $region20
        $region19: #{tpu_custom_call.1} parent=11 // pred_region
          _
        $region20: #{tpu_custom_call.1} parent=11 // pred_fallthru
          _
        // Predicated region
        $region21: #{tpu_custom_call.1} parent=11 // pred_check
          %p184 = pneg %p111
        $region22: #{tpu_custom_call.1} parent=11 // pred_check_branch
          %186 = sbr.rel (%p184) target = $region24
        $region23: #{tpu_custom_call.1} parent=11 // pred_region
          %s188 = ssub.s32 9216, 9216
          %189 = vsyncadd [#allocation6], %s188
          %s190 = sshll.u32 [#allocation5], 4
          %s191 = int_to_ptr.vmem [resolvable:$true] %s190
          %196 = dma.hbm_to_vmem [thread:$0]  %s3, 9216, %s191, [#allocation6], 64, 64, 4
        $region24: #{tpu_custom_call.1} parent=11 // pred_fallthru
          _
      $region12: #{tpu_custom_call.1} parent=5 // pred_fallthru
        _
      %p197 = scmp.lt.s32.totalorder %s22, 2
      // Predicated region
      $region25: #{tpu_custom_call.1} parent=5 // pred_check
        %p198 = pneg %p197
      $region26: #{tpu_custom_call.1} parent=5 // pred_check_branch
        %200 = sbr.rel (%p198) target = $region28
      $region27: #{tpu_custom_call.1} parent=5 // pred_region
        // Predicated region
        $region29: #{tpu_custom_call.1} parent=27 // pred_check
          %p201 = pneg %p42
        $region30: #{tpu_custom_call.1} parent=27 // pred_check_branch
          %203 = sbr.rel (%p201) target = $region32
        $region31: #{tpu_custom_call.1} parent=27 // pred_region
          %s204 = sand.u32 %s32, 1
          %s205 = scalar_lea.sflag [#allocation3], %s204
          %s206 = sand.u32 %s32, 1
          %s207 = smul.addr %s206, 128
          %s208 = scalar_lea.vmem [#allocation2], %s207
          %s210 = ssub.s32 2048, 2048
          %211 = vsyncadd %s205, %s210
          %s212 = smul.addr %s22, 32
          %s213 = smul.addr %s212, 64
          %s214 = scalar_lea.hbm %s0, %s213
          %s215 = sshll.u32 %s208, 4
          %s216 = int_to_ptr.vmem [resolvable:$true] %s215
          %221 = dma.hbm_to_vmem [thread:$0]  %s214, 2048, %s216, %s205, 64, 64, 4
        $region32: #{tpu_custom_call.1} parent=27 // pred_fallthru
          _
      $region28: #{tpu_custom_call.1} parent=5 // pred_fallthru
        _
      %p222 = scmp.le.s32.totalorder 1, %s22
      %p223 = scmp.lt.s32.totalorder %s22, 3
      %p224 = pnand %p222, %p223
      %p225 = pneg %p224
      // Predicated region
      $region33: #{tpu_custom_call.1} parent=5 // pred_check
        _
      $region34: #{tpu_custom_call.1} parent=5 // pred_check_branch
        %227 = sbr.rel (%p224) target = $region36
      $region35: #{tpu_custom_call.1} parent=5 // pred_region
        %s228 = ssub.s32 %s22, 1
        %s229 = sand.u32 %s35, 1
        %s230 = scalar_lea.sflag [#allocation3], %s229
        %s231 = sand.u32 %s35, 1
        %s232 = smul.addr %s231, 128
        %s233 = scalar_lea.vmem [#allocation2], %s232
        // Predicated region
        $region37: #{tpu_custom_call.1} parent=35 // pred_check
          %p234 = pneg %p48
        $region38: #{tpu_custom_call.1} parent=35 // pred_check_branch
          %236 = sbr.rel (%p234) target = $region40
        $region39: #{tpu_custom_call.1} parent=35 // pred_region
          %237 = dma.done %s230, 2048
        $region40: #{tpu_custom_call.1} parent=35 // pred_fallthru
          _
        // Predicated region
        $region41: #{tpu_custom_call.1} parent=35 // pred_check
          %p238 = pneg %p111
        $region42: #{tpu_custom_call.1} parent=35 // pred_check_branch
          %240 = sbr.rel (%p238) target = $region44
        $region43: #{tpu_custom_call.1} parent=35 // pred_region
          %241 = dma.done [#allocation6], 9216
        $region44: #{tpu_custom_call.1} parent=35 // pred_fallthru
          _
        %s242 = sand.u32 %s35, 1
        %s243 = scalar_lea.sflag [#allocation3], %s242
        %s244 = sand.u32 %s35, 1
        %s245 = smul.addr %s244, 128
        %s246 = scalar_lea.vmem [#allocation2], %s245
        %p247 = pneg %p48
        %p248 = pneg %p45
        %p249 = pneg %p69
        %p250 = pneg %p66
        %p251 = pneg %p90
        %p252 = pneg %p87
        %p253 = pneg %p111
        %p254 = pneg %p108
        %p255 = pneg %p137
        %p256 = pneg %p134
        %s257 = sand.u32 %s124, 1
        %s258 = scalar_lea.sflag [#allocation4], %s257
        %s259 = sand.u32 %s124, 1
        %s260 = smul.addr %s259, 256
        %s261 = scalar_lea.vmem [#allocation7], %s260
        %p262 = pneg %p163
        %p263 = pneg %p160
        %s264 = sand.u32 %s150, 1
        %s265 = scalar_lea.sflag [#allocation9], %s264
        %s266 = sand.u32 %s150, 1
        %s267 = smul.addr %s266, 2
        %s268 = scalar_lea.vmem [#allocation8], %s267
        %v270 = vld [vmem:[%s233] sm:$0xf]
        %v271 = vld [vmem:[%s233 + $0x4] sm:$0xf]
        %v272 = vld [vmem:[%s233 + $0x8] sm:$0xf]
        %v273 = vld [vmem:[%s233 + $0xc] sm:$0xf]
        %v274 = vld [vmem:[%s233 + $0x10] sm:$0xf]
        %v275 = vld [vmem:[%s233 + $0x14] sm:$0xf]
        %v276 = vld [vmem:[%s233 + $0x18] sm:$0xf]
        %v277 = vld [vmem:[%s233 + $0x1c] sm:$0xf]
        %v278 = vld [vmem:[%s233 + $0x20] sm:$0xf]
        %v279 = vld [vmem:[%s233 + $0x24] sm:$0xf]
        %v280 = vld [vmem:[%s233 + $0x28] sm:$0xf]
        %v281 = vld [vmem:[%s233 + $0x2c] sm:$0xf]
        %v282 = vld [vmem:[%s233 + $0x30] sm:$0xf]
        %v283 = vld [vmem:[%s233 + $0x34] sm:$0xf]
        %v284 = vld [vmem:[%s233 + $0x38] sm:$0xf]
        %v285 = vld [vmem:[%s233 + $0x3c] sm:$0xf]
        %v286 = vld [vmem:[%s233 + $0x40] sm:$0xf]
        %v287 = vld [vmem:[%s233 + $0x44] sm:$0xf]
        %v288 = vld [vmem:[%s233 + $0x48] sm:$0xf]
        %v289 = vld [vmem:[%s233 + $0x4c] sm:$0xf]
        %v290 = vld [vmem:[%s233 + $0x50] sm:$0xf]
        %v291 = vld [vmem:[%s233 + $0x54] sm:$0xf]
        %v292 = vld [vmem:[%s233 + $0x58] sm:$0xf]
        %v293 = vld [vmem:[%s233 + $0x5c] sm:$0xf]
        %v294 = vld [vmem:[%s233 + $0x60] sm:$0xf]
        %v295 = vld [vmem:[%s233 + $0x64] sm:$0xf]
        %v296 = vld [vmem:[%s233 + $0x68] sm:$0xf]
        %v297 = vld [vmem:[%s233 + $0x6c] sm:$0xf]
        %v298 = vld [vmem:[%s233 + $0x70] sm:$0xf]
        %v299 = vld [vmem:[%s233 + $0x74] sm:$0xf]
        %v300 = vld [vmem:[%s233 + $0x78] sm:$0xf]
        %v301 = vld [vmem:[%s233 + $0x7c] sm:$0xf]
        %v302 = vunpack.c.l.bf16 %v270
        %v303 = vunpack.c.l.bf16 %v271
        %v304 = vunpack.c.l.bf16 %v272
        %v305 = vunpack.c.l.bf16 %v273
        %v306 = vunpack.c.l.bf16 %v274
        %v307 = vunpack.c.l.bf16 %v275
        %v308 = vunpack.c.l.bf16 %v276
        %v309 = vunpack.c.l.bf16 %v277
        %v310 = vunpack.c.l.bf16 %v278
        %v311 = vunpack.c.l.bf16 %v279
        %v312 = vunpack.c.l.bf16 %v280
        %v313 = vunpack.c.l.bf16 %v281
        %v314 = vunpack.c.l.bf16 %v282
        %v315 = vunpack.c.l.bf16 %v283
        %v316 = vunpack.c.l.bf16 %v284
        %v317 = vunpack.c.l.bf16 %v285
        %v318 = vunpack.c.l.bf16 %v286
        %v319 = vunpack.c.l.bf16 %v287
        %v320 = vunpack.c.l.bf16 %v288
        %v321 = vunpack.c.l.bf16 %v289
        %v322 = vunpack.c.l.bf16 %v290
        %v323 = vunpack.c.l.bf16 %v291
        %v324 = vunpack.c.l.bf16 %v292
        %v325 = vunpack.c.l.bf16 %v293
        %v326 = vunpack.c.l.bf16 %v294
        %v327 = vunpack.c.l.bf16 %v295
        %v328 = vunpack.c.l.bf16 %v296
        %v329 = vunpack.c.l.bf16 %v297
        %v330 = vunpack.c.l.bf16 %v298
        %v331 = vunpack.c.l.bf16 %v299
        %v332 = vunpack.c.l.bf16 %v300
        %v333 = vunpack.c.l.bf16 %v301
        %v334 = vlaneseq
        %v335 = vshrl.u32 %v334, 7
        %v336 = vadd.s32 %v335, 8
        %v353 = vrot.slane %v333, 7
        %v354 = vrot.slane %v303, 7
        %v355 = vrot.slane %v305, 7
        %v356 = vrot.slane %v307, 7
        %v357 = vrot.slane %v309, 7
        %v358 = vrot.slane %v311, 7
        %v359 = vrot.slane %v313, 7
        %v360 = vrot.slane %v315, 7
        %v361 = vrot.slane %v317, 7
        %v362 = vrot.slane %v319, 7
        %v363 = vrot.slane %v321, 7
        %v364 = vrot.slane %v323, 7
        %v365 = vrot.slane %v325, 7
        %v366 = vrot.slane %v327, 7
        %v367 = vrot.slane %v329, 7
        %v368 = vrot.slane %v331, 7
        %vm401 = vcmask 1040384
        %v402 = vrot.slane %v332, 7
        %v403 = vsel %vm401, %v402, %v353
        %v404 = vrot.slane %v302, 7
        %v405 = vsel %vm401, %v404, %v354
        %v406 = vrot.slane %v304, 7
        %v407 = vsel %vm401, %v406, %v355
        %v408 = vrot.slane %v306, 7
        %v409 = vsel %vm401, %v408, %v356
        %v410 = vrot.slane %v308, 7
        %v411 = vsel %vm401, %v410, %v357
        %v412 = vrot.slane %v310, 7
        %v413 = vsel %vm401, %v412, %v358
        %v414 = vrot.slane %v312, 7
        %v415 = vsel %vm401, %v414, %v359
        %v416 = vrot.slane %v314, 7
        %v417 = vsel %vm401, %v416, %v360
        %v418 = vrot.slane %v316, 7
        %v419 = vsel %vm401, %v418, %v361
        %v420 = vrot.slane %v318, 7
        %v421 = vsel %vm401, %v420, %v362
        %v422 = vrot.slane %v320, 7
        %v423 = vsel %vm401, %v422, %v363
        %v424 = vrot.slane %v322, 7
        %v425 = vsel %vm401, %v424, %v364
        %v426 = vrot.slane %v324, 7
        %v427 = vsel %vm401, %v426, %v365
        %v428 = vrot.slane %v326, 7
        %v429 = vsel %vm401, %v428, %v366
        %v430 = vrot.slane %v328, 7
        %v431 = vsel %vm401, %v430, %v367
        %v432 = vrot.slane %v330, 7
        %v433 = vsel %vm401, %v432, %v368
        %v466 = vsel %vm401, %v353, %v402
        %v467 = vsel %vm401, %v354, %v404
        %v468 = vsel %vm401, %v355, %v406
        %v469 = vsel %vm401, %v356, %v408
        %v470 = vsel %vm401, %v357, %v410
        %v471 = vsel %vm401, %v358, %v412
        %v472 = vsel %vm401, %v359, %v414
        %v473 = vsel %vm401, %v360, %v416
        %v474 = vsel %vm401, %v361, %v418
        %v475 = vsel %vm401, %v362, %v420
        %v476 = vsel %vm401, %v363, %v422
        %v477 = vsel %vm401, %v364, %v424
        %v478 = vsel %vm401, %v365, %v426
        %v479 = vsel %vm401, %v366, %v428
        %v480 = vsel %vm401, %v367, %v430
        %v481 = vsel %vm401, %v368, %v432
        %v482 = vadd.s32 %v335, 4294967295
        %v483 = vadd.s32 %v336, 4294967295
        %vm484 = vcmp.ge.s32.totalorder %v482, 0
        %vm485 = vcmp.ge.s32.totalorder %v483, 0
        %vm486 = vmand 0, %vm484
        %vm487 = vmand 0, %vm485
        %vm488 = vmand 1, %vm484
        %vm489 = vmand 1, %vm485
        %vm490 = vcmp.lt.s32.totalorder %v482, 16
        %vm491 = vcmp.lt.s32.totalorder %v483, 16
        %vm492 = vmand %vm486, %vm490
        %vm493 = vmand %vm487, %vm491
        %vm494 = vmand %vm488, %vm490
        %vm495 = vmand %vm489, %vm491
        %v496 = vsel %vm492, 1, 0
        %v497 = vsel %vm493, 1, 0
        %v498 = vsel %vm494, 1, 0
        %v499 = vsel %vm495, 1, 0
        %vm500 = vcmp.eq.s32.totalorder %v496, 1
        %vm501 = vcmp.eq.s32.totalorder %v497, 1
        %vm502 = vcmp.eq.s32.totalorder %v498, 1
        %vm503 = vcmp.eq.s32.totalorder %v499, 1
        %v504 = vsel %vm500, %v466, 0.0
        %v505 = vsel %vm501, %v403, 0.0
        %v506 = vsel %vm502, %v467, 0.0
        %v507 = vsel %vm503, %v405, 0.0
        %v508 = vsel %vm502, %v468, 0.0
        %v509 = vsel %vm503, %v407, 0.0
        %v510 = vsel %vm502, %v469, 0.0
        %v511 = vsel %vm503, %v409, 0.0
        %v512 = vsel %vm502, %v470, 0.0
        %v513 = vsel %vm503, %v411, 0.0
        %v514 = vsel %vm502, %v471, 0.0
        %v515 = vsel %vm503, %v413, 0.0
        %v516 = vsel %vm502, %v472, 0.0
        %v517 = vsel %vm503, %v415, 0.0
        %v518 = vsel %vm502, %v473, 0.0
        %v519 = vsel %vm503, %v417, 0.0
        %v520 = vsel %vm502, %v474, 0.0
        %v521 = vsel %vm503, %v419, 0.0
        %v522 = vsel %vm502, %v475, 0.0
        %v523 = vsel %vm503, %v421, 0.0
        %v524 = vsel %vm502, %v476, 0.0
        %v525 = vsel %vm503, %v423, 0.0
        %v526 = vsel %vm502, %v477, 0.0
        %v527 = vsel %vm503, %v425, 0.0
        %v528 = vsel %vm502, %v478, 0.0
        %v529 = vsel %vm503, %v427, 0.0
        %v530 = vsel %vm502, %v479, 0.0
        %v531 = vsel %vm503, %v429, 0.0
        %v532 = vsel %vm502, %v480, 0.0
        %v533 = vsel %vm503, %v431, 0.0
        %v534 = vsel %vm502, %v481, 0.0
        %v535 = vsel %vm503, %v433, 0.0
        %vm536 = vcmp.ge.s32.totalorder %v335, 0
        %vm537 = vcmp.ge.s32.totalorder %v336, 0
        %vm538 = vmand 0, %vm536
        %vm539 = vmand 0, %vm537
        %vm540 = vmand 1, %vm536
        %vm541 = vmand 1, %vm537
        %vm542 = vcmp.lt.s32.totalorder %v335, 16
        %vm543 = vcmp.lt.s32.totalorder %v336, 16
        %vm544 = vmand %vm538, %vm542
        %vm545 = vmand %vm539, %vm543
        %vm546 = vmand %vm540, %vm542
        %vm547 = vmand %vm541, %vm543
        %v548 = vsel %vm544, 1, 0
        %v549 = vsel %vm545, 1, 0
        %v550 = vsel %vm546, 1, 0
        %v551 = vsel %vm547, 1, 0
        %vm552 = vcmp.eq.s32.totalorder %v548, 1
        %vm553 = vcmp.eq.s32.totalorder %v549, 1
        %vm554 = vcmp.eq.s32.totalorder %v550, 1
        %vm555 = vcmp.eq.s32.totalorder %v551, 1
        %v556 = vsel %vm552, %v332, 0.0
        %v557 = vsel %vm553, %v333, 0.0
        %v558 = vsel %vm554, %v302, 0.0
        %v559 = vsel %vm555, %v303, 0.0
        %v560 = vsel %vm554, %v304, 0.0
        %v561 = vsel %vm555, %v305, 0.0
        %v562 = vsel %vm554, %v306, 0.0
        %v563 = vsel %vm555, %v307, 0.0
        %v564 = vsel %vm554, %v308, 0.0
        %v565 = vsel %vm555, %v309, 0.0
        %v566 = vsel %vm554, %v310, 0.0
        %v567 = vsel %vm555, %v311, 0.0
        %v568 = vsel %vm554, %v312, 0.0
        %v569 = vsel %vm555, %v313, 0.0
        %v570 = vsel %vm554, %v314, 0.0
        %v571 = vsel %vm555, %v315, 0.0
        %v572 = vsel %vm554, %v316, 0.0
        %v573 = vsel %vm555, %v317, 0.0
        %v574 = vsel %vm554, %v318, 0.0
        %v575 = vsel %vm555, %v319, 0.0
        %v576 = vsel %vm554, %v320, 0.0
        %v577 = vsel %vm555, %v321, 0.0
        %v578 = vsel %vm554, %v322, 0.0
        %v579 = vsel %vm555, %v323, 0.0
        %v580 = vsel %vm554, %v324, 0.0
        %v581 = vsel %vm555, %v325, 0.0
        %v582 = vsel %vm554, %v326, 0.0
        %v583 = vsel %vm555, %v327, 0.0
        %v584 = vsel %vm554, %v328, 0.0
        %v585 = vsel %vm555, %v329, 0.0
        %v586 = vsel %vm554, %v330, 0.0
        %v587 = vsel %vm555, %v331, 0.0
        %vm588 = vcmask 1046528
        %v589 = vrot.slane %v332, 1
        %v590 = vrot.slane %v333, 1
        %v591 = vsel %vm588, %v589, %v590
        %v592 = vrot.slane %v302, 1
        %v593 = vrot.slane %v303, 1
        %v594 = vsel %vm588, %v592, %v593
        %v595 = vrot.slane %v304, 1
        %v596 = vrot.slane %v305, 1
        %v597 = vsel %vm588, %v595, %v596
        %v598 = vrot.slane %v306, 1
        %v599 = vrot.slane %v307, 1
        %v600 = vsel %vm588, %v598, %v599
        %v601 = vrot.slane %v308, 1
        %v602 = vrot.slane %v309, 1
        %v603 = vsel %vm588, %v601, %v602
        %v604 = vrot.slane %v310, 1
        %v605 = vrot.slane %v311, 1
        %v606 = vsel %vm588, %v604, %v605
        %v607 = vrot.slane %v312, 1
        %v608 = vrot.slane %v313, 1
        %v609 = vsel %vm588, %v607, %v608
        %v610 = vrot.slane %v314, 1
        %v611 = vrot.slane %v315, 1
        %v612 = vsel %vm588, %v610, %v611
        %v613 = vrot.slane %v316, 1
        %v614 = vrot.slane %v317, 1
        %v615 = vsel %vm588, %v613, %v614
        %v616 = vrot.slane %v318, 1
        %v617 = vrot.slane %v319, 1
        %v618 = vsel %vm588, %v616, %v617
        %v619 = vrot.slane %v320, 1
        %v620 = vrot.slane %v321, 1
        %v621 = vsel %vm588, %v619, %v620
        %v622 = vrot.slane %v322, 1
        %v623 = vrot.slane %v323, 1
        %v624 = vsel %vm588, %v622, %v623
        %v625 = vrot.slane %v324, 1
        %v626 = vrot.slane %v325, 1
        %v627 = vsel %vm588, %v625, %v626
        %v628 = vrot.slane %v326, 1
        %v629 = vrot.slane %v327, 1
        %v630 = vsel %vm588, %v628, %v629
        %v631 = vrot.slane %v328, 1
        %v632 = vrot.slane %v329, 1
        %v633 = vsel %vm588, %v631, %v632
        %v634 = vrot.slane %v330, 1
        %v635 = vrot.slane %v331, 1
        %v636 = vsel %vm588, %v634, %v635
        %v685 = vsel %vm588, %v590, %v589
        %v686 = vsel %vm588, %v593, %v592
        %v687 = vsel %vm588, %v596, %v595
        %v688 = vsel %vm588, %v599, %v598
        %v689 = vsel %vm588, %v602, %v601
        %v690 = vsel %vm588, %v605, %v604
        %v691 = vsel %vm588, %v608, %v607
        %v692 = vsel %vm588, %v611, %v610
        %v693 = vsel %vm588, %v614, %v613
        %v694 = vsel %vm588, %v617, %v616
        %v695 = vsel %vm588, %v620, %v619
        %v696 = vsel %vm588, %v623, %v622
        %v697 = vsel %vm588, %v626, %v625
        %v698 = vsel %vm588, %v629, %v628
        %v699 = vsel %vm588, %v632, %v631
        %v700 = vsel %vm588, %v635, %v634
        %v701 = vadd.s32 %v335, 1
        %v702 = vadd.s32 %v336, 1
        %vm703 = vcmp.ge.s32.totalorder %v701, 0
        %vm704 = vcmp.ge.s32.totalorder %v702, 0
        %vm705 = vmand 0, %vm703
        %vm706 = vmand 0, %vm704
        %vm707 = vmand 1, %vm703
        %vm708 = vmand 1, %vm704
        %vm709 = vcmp.lt.s32.totalorder %v701, 16
        %vm710 = vcmp.lt.s32.totalorder %v702, 16
        %vm711 = vmand %vm705, %vm709
        %vm712 = vmand %vm706, %vm710
        %vm713 = vmand %vm707, %vm709
        %vm714 = vmand %vm708, %vm710
        %v715 = vsel %vm711, 1, 0
        %v716 = vsel %vm712, 1, 0
        %v717 = vsel %vm713, 1, 0
        %v718 = vsel %vm714, 1, 0
        %vm719 = vcmp.eq.s32.totalorder %v715, 1
        %vm720 = vcmp.eq.s32.totalorder %v716, 1
        %vm721 = vcmp.eq.s32.totalorder %v717, 1
        %vm722 = vcmp.eq.s32.totalorder %v718, 1
        %v723 = vsel %vm719, %v591, 0.0
        %v724 = vsel %vm720, %v685, 0.0
        %v725 = vsel %vm721, %v594, 0.0
        %v726 = vsel %vm722, %v686, 0.0
        %v727 = vsel %vm721, %v597, 0.0
        %v728 = vsel %vm722, %v687, 0.0
        %v729 = vsel %vm721, %v600, 0.0
        %v730 = vsel %vm722, %v688, 0.0
        %v731 = vsel %vm721, %v603, 0.0
        %v732 = vsel %vm722, %v689, 0.0
        %v733 = vsel %vm721, %v606, 0.0
        %v734 = vsel %vm722, %v690, 0.0
        %v735 = vsel %vm721, %v609, 0.0
        %v736 = vsel %vm722, %v691, 0.0
        %v737 = vsel %vm721, %v612, 0.0
        %v738 = vsel %vm722, %v692, 0.0
        %v739 = vsel %vm721, %v615, 0.0
        %v740 = vsel %vm722, %v693, 0.0
        %v741 = vsel %vm721, %v618, 0.0
        %v742 = vsel %vm722, %v694, 0.0
        %v743 = vsel %vm721, %v621, 0.0
        %v744 = vsel %vm722, %v695, 0.0
        %v745 = vsel %vm721, %v624, 0.0
        %v746 = vsel %vm722, %v696, 0.0
        %v747 = vsel %vm721, %v627, 0.0
        %v748 = vsel %vm722, %v697, 0.0
        %v749 = vsel %vm721, %v630, 0.0
        %v750 = vsel %vm722, %v698, 0.0
        %v751 = vsel %vm721, %v633, 0.0
        %v752 = vsel %vm722, %v699, 0.0
        %v753 = vsel %vm721, %v636, 0.0
        %v754 = vsel %vm722, %v700, 0.0
        %v755 = vsel %vm502, %v466, 0.0
        %v756 = vsel %vm503, %v403, 0.0
        %v757 = vsel %vm554, %v332, 0.0
        %v758 = vsel %vm555, %v333, 0.0
        %v759 = vsel %vm721, %v591, 0.0
        %v760 = vsel %vm722, %v685, 0.0
        %v761 = vsel %vm500, %v467, 0.0
        %v762 = vsel %vm501, %v405, 0.0
        %v763 = vsel %vm552, %v302, 0.0
        %v764 = vsel %vm553, %v303, 0.0
        %v765 = vsel %vm719, %v594, 0.0
        %v766 = vsel %vm720, %v686, 0.0
        %v767 = vpack.c.bf16 %v505, %v504
        %v768 = vpack.c.bf16 %v557, %v556
        %v769 = vpack.c.bf16 %v724, %v723
        %v770 = vpack.c.bf16 %v507, %v506
        %v771 = vpack.c.bf16 %v559, %v558
        %v772 = vpack.c.bf16 %v726, %v725
        %v773 = vpack.c.bf16 %v509, %v508
        %v774 = vpack.c.bf16 %v561, %v560
        %v775 = vpack.c.bf16 %v728, %v727
        %v776 = vpack.c.bf16 %v511, %v510
        %v777 = vpack.c.bf16 %v563, %v562
        %v778 = vpack.c.bf16 %v730, %v729
        %v779 = vpack.c.bf16 %v513, %v512
        %v780 = vpack.c.bf16 %v565, %v564
        %v781 = vpack.c.bf16 %v732, %v731
        %v782 = vpack.c.bf16 %v515, %v514
        %v783 = vpack.c.bf16 %v567, %v566
        %v784 = vpack.c.bf16 %v734, %v733
        %v785 = vpack.c.bf16 %v517, %v516
        %v786 = vpack.c.bf16 %v569, %v568
        %v787 = vpack.c.bf16 %v736, %v735
        %v788 = vpack.c.bf16 %v519, %v518
        %v789 = vpack.c.bf16 %v571, %v570
        %v790 = vpack.c.bf16 %v738, %v737
        %v791 = vpack.c.bf16 %v521, %v520
        %v792 = vpack.c.bf16 %v573, %v572
        %v793 = vpack.c.bf16 %v740, %v739
        %v794 = vpack.c.bf16 %v523, %v522
        %v795 = vpack.c.bf16 %v575, %v574
        %v796 = vpack.c.bf16 %v742, %v741
        %v797 = vpack.c.bf16 %v525, %v524
        %v798 = vpack.c.bf16 %v577, %v576
        %v799 = vpack.c.bf16 %v744, %v743
        %v800 = vpack.c.bf16 %v527, %v526
        %v801 = vpack.c.bf16 %v579, %v578
        %v802 = vpack.c.bf16 %v746, %v745
        %v803 = vpack.c.bf16 %v529, %v528
        %v804 = vpack.c.bf16 %v581, %v580
        %v805 = vpack.c.bf16 %v748, %v747
        %v806 = vpack.c.bf16 %v531, %v530
        %v807 = vpack.c.bf16 %v583, %v582
        %v808 = vpack.c.bf16 %v750, %v749
        %v809 = vpack.c.bf16 %v533, %v532
        %v810 = vpack.c.bf16 %v585, %v584
        %v811 = vpack.c.bf16 %v752, %v751
        %v812 = vpack.c.bf16 %v535, %v534
        %v813 = vpack.c.bf16 %v587, %v586
        %v814 = vpack.c.bf16 %v754, %v753
        %v815 = vpack.c.bf16 %v756, %v755
        %v816 = vpack.c.bf16 %v758, %v757
        %v817 = vpack.c.bf16 %v760, %v759
        %v818 = vpack.c.bf16 %v762, %v761
        %v819 = vpack.c.bf16 %v764, %v763
        %v820 = vpack.c.bf16 %v766, %v765
        %v821 = vld [vmem:[#allocation5] sm:$0xf]
        %v822 = vld [vmem:[#allocation5 + $0x4] sm:$0xf]
        %v823 = vld [vmem:[#allocation5 + $0x8] sm:$0xf]
        %v824 = vld [vmem:[#allocation5 + $0xc] sm:$0xf]
        %v825 = vld [vmem:[#allocation5 + $0x10] sm:$0xf]
        %v826 = vld [vmem:[#allocation5 + $0x14] sm:$0xf]
        %v827 = vld [vmem:[#allocation5 + $0x18] sm:$0xf]
        %v828 = vld [vmem:[#allocation5 + $0x1c] sm:$0xf]
        %v829 = vld [vmem:[#allocation5 + $0x20] sm:$0xf]
        %v830 = vld [vmem:[#allocation5 + $0x24] sm:$0xf]
        %v831 = vld [vmem:[#allocation5 + $0x28] sm:$0xf]
        %v832 = vld [vmem:[#allocation5 + $0x2c] sm:$0xf]
        %v833 = vld [vmem:[#allocation5 + $0x30] sm:$0xf]
        %v834 = vld [vmem:[#allocation5 + $0x34] sm:$0xf]
        %v835 = vld [vmem:[#allocation5 + $0x38] sm:$0xf]
        %v836 = vld [vmem:[#allocation5 + $0x3c] sm:$0xf]
        %v837 = vld [vmem:[#allocation5 + $0x40] sm:$0xf]
        %v838 = vld [vmem:[#allocation5 + $0x44] sm:$0xf]
        %v839 = vld [vmem:[#allocation5 + $0x48] sm:$0xf]
        %v840 = vld [vmem:[#allocation5 + $0x4c] sm:$0xf]
        %v841 = vld [vmem:[#allocation5 + $0x50] sm:$0xf]
        %v842 = vld [vmem:[#allocation5 + $0x54] sm:$0xf]
        %v843 = vld [vmem:[#allocation5 + $0x58] sm:$0xf]
        %v844 = vld [vmem:[#allocation5 + $0x5c] sm:$0xf]
        %v845 = vld [vmem:[#allocation5 + $0x60] sm:$0xf]
        %v846 = vld [vmem:[#allocation5 + $0x64] sm:$0xf]
        %v847 = vld [vmem:[#allocation5 + $0x68] sm:$0xf]
        %v848 = vld [vmem:[#allocation5 + $0x6c] sm:$0xf]
        %v849 = vld [vmem:[#allocation5 + $0x70] sm:$0xf]
        %v850 = vld [vmem:[#allocation5 + $0x74] sm:$0xf]
        %v851 = vld [vmem:[#allocation5 + $0x78] sm:$0xf]
        %v852 = vld [vmem:[#allocation5 + $0x7c] sm:$0xf]
        %v853 = vld [vmem:[#allocation5 + $0x80] sm:$0xf]
        %v854 = vld [vmem:[#allocation5 + $0x84] sm:$0xf]
        %v855 = vld [vmem:[#allocation5 + $0x88] sm:$0xf]
        %v856 = vld [vmem:[#allocation5 + $0x8c] sm:$0xf]
        %v857 = vld [vmem:[#allocation5 + $0x90] sm:$0xf]
        %v858 = vld [vmem:[#allocation5 + $0x94] sm:$0xf]
        %v859 = vld [vmem:[#allocation5 + $0x98] sm:$0xf]
        %v860 = vld [vmem:[#allocation5 + $0x9c] sm:$0xf]
        %v861 = vld [vmem:[#allocation5 + $0xa0] sm:$0xf]
        %v862 = vld [vmem:[#allocation5 + $0xa4] sm:$0xf]
        %v863 = vld [vmem:[#allocation5 + $0xa8] sm:$0xf]
        %v864 = vld [vmem:[#allocation5 + $0xac] sm:$0xf]
        %v865 = vld [vmem:[#allocation5 + $0xb0] sm:$0xf]
        %v866 = vld [vmem:[#allocation5 + $0xb4] sm:$0xf]
        %v867 = vld [vmem:[#allocation5 + $0xb8] sm:$0xf]
        %v868 = vld [vmem:[#allocation5 + $0xbc] sm:$0xf]
        %v869 = vld [vmem:[#allocation5 + $0xc0] sm:$0xf]
        %v870 = vld [vmem:[#allocation5 + $0xc4] sm:$0xf]
        %v871 = vld [vmem:[#allocation5 + $0xc8] sm:$0xf]
        %v872 = vld [vmem:[#allocation5 + $0xcc] sm:$0xf]
        %v873 = vld [vmem:[#allocation5 + $0xd0] sm:$0xf]
        %v874 = vld [vmem:[#allocation5 + $0xd4] sm:$0xf]
        %v875 = vld [vmem:[#allocation5 + $0xd8] sm:$0xf]
        %v876 = vld [vmem:[#allocation5 + $0xdc] sm:$0xf]
        %v877 = vld [vmem:[#allocation5 + $0xe0] sm:$0xf]
        %v878 = vld [vmem:[#allocation5 + $0xe4] sm:$0xf]
        %v879 = vld [vmem:[#allocation5 + $0xe8] sm:$0xf]
        %v880 = vld [vmem:[#allocation5 + $0xec] sm:$0xf]
        %v881 = vld [vmem:[#allocation5 + $0xf0] sm:$0xf]
        %v882 = vld [vmem:[#allocation5 + $0xf4] sm:$0xf]
        %v883 = vld [vmem:[#allocation5 + $0xf8] sm:$0xf]
        %v884 = vld [vmem:[#allocation5 + $0xfc] sm:$0xf]
        %v885 = vld [vmem:[#allocation5 + $0x100] sm:$0xf]
        %v886 = vld [vmem:[#allocation5 + $0x104] sm:$0xf]
        %v887 = vld [vmem:[#allocation5 + $0x108] sm:$0xf]
        %v888 = vld [vmem:[#allocation5 + $0x10c] sm:$0xf]
        %v889 = vld [vmem:[#allocation5 + $0x110] sm:$0xf]
        %v890 = vld [vmem:[#allocation5 + $0x114] sm:$0xf]
        %v891 = vld [vmem:[#allocation5 + $0x118] sm:$0xf]
        %v892 = vld [vmem:[#allocation5 + $0x11c] sm:$0xf]
        %v893 = vld [vmem:[#allocation5 + $0x120] sm:$0xf]
        %v894 = vld [vmem:[#allocation5 + $0x124] sm:$0xf]
        %v895 = vld [vmem:[#allocation5 + $0x128] sm:$0xf]
        %v896 = vld [vmem:[#allocation5 + $0x12c] sm:$0xf]
        %v897 = vld [vmem:[#allocation5 + $0x130] sm:$0xf]
        %v898 = vld [vmem:[#allocation5 + $0x134] sm:$0xf]
        %v899 = vld [vmem:[#allocation5 + $0x138] sm:$0xf]
        %v900 = vld [vmem:[#allocation5 + $0x13c] sm:$0xf]
        %v901 = vld [vmem:[#allocation5 + $0x140] sm:$0xf]
        %v902 = vld [vmem:[#allocation5 + $0x144] sm:$0xf]
        %v903 = vld [vmem:[#allocation5 + $0x148] sm:$0xf]
        %v904 = vld [vmem:[#allocation5 + $0x14c] sm:$0xf]
        %v905 = vld [vmem:[#allocation5 + $0x150] sm:$0xf]
        %v906 = vld [vmem:[#allocation5 + $0x154] sm:$0xf]
        %v907 = vld [vmem:[#allocation5 + $0x158] sm:$0xf]
        %v908 = vld [vmem:[#allocation5 + $0x15c] sm:$0xf]
        %v909 = vld [vmem:[#allocation5 + $0x160] sm:$0xf]
        %v910 = vld [vmem:[#allocation5 + $0x164] sm:$0xf]
        %v911 = vld [vmem:[#allocation5 + $0x168] sm:$0xf]
        %v912 = vld [vmem:[#allocation5 + $0x16c] sm:$0xf]
        %v913 = vld [vmem:[#allocation5 + $0x170] sm:$0xf]
        %v914 = vld [vmem:[#allocation5 + $0x174] sm:$0xf]
        %v915 = vld [vmem:[#allocation5 + $0x178] sm:$0xf]
        %v916 = vld [vmem:[#allocation5 + $0x17c] sm:$0xf]
        %v917 = vld [vmem:[#allocation5 + $0x180] sm:$0xf]
        %v918 = vld [vmem:[#allocation5 + $0x184] sm:$0xf]
        %v919 = vld [vmem:[#allocation5 + $0x188] sm:$0xf]
        %v920 = vld [vmem:[#allocation5 + $0x18c] sm:$0xf]
        %v921 = vld [vmem:[#allocation5 + $0x190] sm:$0xf]
        %v922 = vld [vmem:[#allocation5 + $0x194] sm:$0xf]
        %v923 = vld [vmem:[#allocation5 + $0x198] sm:$0xf]
        %v924 = vld [vmem:[#allocation5 + $0x19c] sm:$0xf]
        %v925 = vld [vmem:[#allocation5 + $0x1a0] sm:$0xf]
        %v926 = vld [vmem:[#allocation5 + $0x1a4] sm:$0xf]
        %v927 = vld [vmem:[#allocation5 + $0x1a8] sm:$0xf]
        %v928 = vld [vmem:[#allocation5 + $0x1ac] sm:$0xf]
        %v929 = vld [vmem:[#allocation5 + $0x1b0] sm:$0xf]
        %v930 = vld [vmem:[#allocation5 + $0x1b4] sm:$0xf]
        %v931 = vld [vmem:[#allocation5 + $0x1b8] sm:$0xf]
        %v932 = vld [vmem:[#allocation5 + $0x1bc] sm:$0xf]
        %v933 = vld [vmem:[#allocation5 + $0x1c0] sm:$0xf]
        %v934 = vld [vmem:[#allocation5 + $0x1c4] sm:$0xf]
        %v935 = vld [vmem:[#allocation5 + $0x1c8] sm:$0xf]
        %v936 = vld [vmem:[#allocation5 + $0x1cc] sm:$0xf]
        %v937 = vld [vmem:[#allocation5 + $0x1d0] sm:$0xf]
        %v938 = vld [vmem:[#allocation5 + $0x1d4] sm:$0xf]
        %v939 = vld [vmem:[#allocation5 + $0x1d8] sm:$0xf]
        %v940 = vld [vmem:[#allocation5 + $0x1dc] sm:$0xf]
        %v941 = vld [vmem:[#allocation5 + $0x1e0] sm:$0xf]
        %v942 = vld [vmem:[#allocation5 + $0x1e4] sm:$0xf]
        %v943 = vld [vmem:[#allocation5 + $0x1e8] sm:$0xf]
        %v944 = vld [vmem:[#allocation5 + $0x1ec] sm:$0xf]
        %v945 = vld [vmem:[#allocation5 + $0x1f0] sm:$0xf]
        %v946 = vld [vmem:[#allocation5 + $0x1f4] sm:$0xf]
        %v947 = vld [vmem:[#allocation5 + $0x1f8] sm:$0xf]
        %v948 = vld [vmem:[#allocation5 + $0x1fc] sm:$0xf]
        %v949 = vld [vmem:[#allocation5 + $0x200] sm:$0xf]
        %v950 = vld [vmem:[#allocation5 + $0x204] sm:$0xf]
        %v951 = vld [vmem:[#allocation5 + $0x208] sm:$0xf]
        %v952 = vld [vmem:[#allocation5 + $0x20c] sm:$0xf]
        %v953 = vld [vmem:[#allocation5 + $0x210] sm:$0xf]
        %v954 = vld [vmem:[#allocation5 + $0x214] sm:$0xf]
        %v955 = vld [vmem:[#allocation5 + $0x218] sm:$0xf]
        %v956 = vld [vmem:[#allocation5 + $0x21c] sm:$0xf]
        %v957 = vld [vmem:[#allocation5 + $0x220] sm:$0xf]
        %v958 = vld [vmem:[#allocation5 + $0x224] sm:$0xf]
        %v959 = vld [vmem:[#allocation5 + $0x228] sm:$0xf]
        %v960 = vld [vmem:[#allocation5 + $0x22c] sm:$0xf]
        %v961 = vld [vmem:[#allocation5 + $0x230] sm:$0xf]
        %v962 = vld [vmem:[#allocation5 + $0x234] sm:$0xf]
        %v963 = vld [vmem:[#allocation5 + $0x238] sm:$0xf]
        %v964 = vld [vmem:[#allocation5 + $0x23c] sm:$0xf]
        %v1109 = vunpack.c.l.b16 %v821
        %v1110 = vunpack.c.l.b16 %v822
        %v1111 = vunpack.c.l.b16 %v823
        %v1112 = vunpack.c.l.b16 %v824
        %v1113 = vunpack.c.l.b16 %v825
        %v1114 = vunpack.c.l.b16 %v826
        %v1115 = vunpack.c.l.b16 %v827
        %v1116 = vunpack.c.l.b16 %v828
        %v1117 = vunpack.c.l.b16 %v829
        %v1118 = vunpack.c.l.b16 %v830
        %v1119 = vunpack.c.l.b16 %v831
        %v1120 = vunpack.c.l.b16 %v832
        %v1121 = vunpack.c.l.b16 %v833
        %v1122 = vunpack.c.l.b16 %v834
        %v1123 = vunpack.c.l.b16 %v835
        %v1124 = vunpack.c.l.b16 %v836
        %v1125 = vunpack.c.l.b16 %v837
        %v1126 = vunpack.c.l.b16 %v838
        %v1127 = vunpack.c.l.b16 %v839
        %v1128 = vunpack.c.l.b16 %v840
        %v1129 = vunpack.c.l.b16 %v841
        %v1130 = vunpack.c.l.b16 %v842
        %v1131 = vunpack.c.l.b16 %v843
        %v1132 = vunpack.c.l.b16 %v844
        %v1133 = vunpack.c.l.b16 %v845
        %v1134 = vunpack.c.l.b16 %v846
        %v1135 = vunpack.c.l.b16 %v847
        %v1136 = vunpack.c.l.b16 %v848
        %v1137 = vunpack.c.l.b16 %v849
        %v1138 = vunpack.c.l.b16 %v850
        %v1139 = vunpack.c.l.b16 %v851
        %v1140 = vunpack.c.l.b16 %v852
        %v1141 = vunpack.c.l.b16 %v853
        %v1142 = vunpack.c.l.b16 %v854
        %v1143 = vunpack.c.l.b16 %v855
        %v1144 = vunpack.c.l.b16 %v856
        %v1145 = vunpack.c.l.b16 %v857
        %v1146 = vunpack.c.l.b16 %v858
        %v1147 = vunpack.c.l.b16 %v859
        %v1148 = vunpack.c.l.b16 %v860
        %v1149 = vunpack.c.l.b16 %v861
        %v1150 = vunpack.c.l.b16 %v862
        %v1151 = vunpack.c.l.b16 %v863
        %v1152 = vunpack.c.l.b16 %v864
        %v1153 = vunpack.c.l.b16 %v865
        %v1154 = vunpack.c.l.b16 %v866
        %v1155 = vunpack.c.l.b16 %v867
        %v1156 = vunpack.c.l.b16 %v868
        %v1157 = vunpack.c.l.b16 %v869
        %v1158 = vunpack.c.l.b16 %v870
        %v1159 = vunpack.c.l.b16 %v871
        %v1160 = vunpack.c.l.b16 %v872
        %v1161 = vunpack.c.l.b16 %v873
        %v1162 = vunpack.c.l.b16 %v874
        %v1163 = vunpack.c.l.b16 %v875
        %v1164 = vunpack.c.l.b16 %v876
        %v1165 = vunpack.c.l.b16 %v877
        %v1166 = vunpack.c.l.b16 %v878
        %v1167 = vunpack.c.l.b16 %v879
        %v1168 = vunpack.c.l.b16 %v880
        %v1169 = vunpack.c.l.b16 %v881
        %v1170 = vunpack.c.l.b16 %v882
        %v1171 = vunpack.c.l.b16 %v883
        %v1172 = vunpack.c.l.b16 %v884
        %v1173 = vunpack.c.l.b16 %v885
        %v1174 = vunpack.c.l.b16 %v886
        %v1175 = vunpack.c.l.b16 %v887
        %v1176 = vunpack.c.l.b16 %v888
        %v1177 = vunpack.c.l.b16 %v889
        %v1178 = vunpack.c.l.b16 %v890
        %v1179 = vunpack.c.l.b16 %v891
        %v1180 = vunpack.c.l.b16 %v892
        %v1181 = vunpack.c.l.b16 %v893
        %v1182 = vunpack.c.l.b16 %v894
        %v1183 = vunpack.c.l.b16 %v895
        %v1184 = vunpack.c.l.b16 %v896
        %v1185 = vunpack.c.l.b16 %v897
        %v1186 = vunpack.c.l.b16 %v898
        %v1187 = vunpack.c.l.b16 %v899
        %v1188 = vunpack.c.l.b16 %v900
        %v1189 = vunpack.c.l.b16 %v901
        %v1190 = vunpack.c.l.b16 %v902
        %v1191 = vunpack.c.l.b16 %v903
        %v1192 = vunpack.c.l.b16 %v904
        %v1193 = vunpack.c.l.b16 %v905
        %v1194 = vunpack.c.l.b16 %v906
        %v1195 = vunpack.c.l.b16 %v907
        %v1196 = vunpack.c.l.b16 %v908
        %v1197 = vunpack.c.l.b16 %v909
        %v1198 = vunpack.c.l.b16 %v910
        %v1199 = vunpack.c.l.b16 %v911
        %v1200 = vunpack.c.l.b16 %v912
        %v1201 = vunpack.c.l.b16 %v913
        %v1202 = vunpack.c.l.b16 %v914
        %v1203 = vunpack.c.l.b16 %v915
        %v1204 = vunpack.c.l.b16 %v916
        %v1205 = vunpack.c.l.b16 %v917
        %v1206 = vunpack.c.l.b16 %v918
        %v1207 = vunpack.c.l.b16 %v919
        %v1208 = vunpack.c.l.b16 %v920
        %v1209 = vunpack.c.l.b16 %v921
        %v1210 = vunpack.c.l.b16 %v922
        %v1211 = vunpack.c.l.b16 %v923
        %v1212 = vunpack.c.l.b16 %v924
        %v1213 = vunpack.c.l.b16 %v925
        %v1214 = vunpack.c.l.b16 %v926
        %v1215 = vunpack.c.l.b16 %v927
        %v1216 = vunpack.c.l.b16 %v928
        %v1217 = vunpack.c.l.b16 %v929
        %v1218 = vunpack.c.l.b16 %v930
        %v1219 = vunpack.c.l.b16 %v931
        %v1220 = vunpack.c.l.b16 %v932
        %v1221 = vunpack.c.l.b16 %v933
        %v1222 = vunpack.c.l.b16 %v934
        %v1223 = vunpack.c.l.b16 %v935
        %v1224 = vunpack.c.l.b16 %v936
        %v1225 = vunpack.c.l.b16 %v937
        %v1226 = vunpack.c.l.b16 %v938
        %v1227 = vunpack.c.l.b16 %v939
        %v1228 = vunpack.c.l.b16 %v940
        %v1229 = vunpack.c.l.b16 %v941
        %v1230 = vunpack.c.l.b16 %v942
        %v1231 = vunpack.c.l.b16 %v943
        %v1232 = vunpack.c.l.b16 %v944
        %v1233 = vunpack.c.l.b16 %v945
        %v1234 = vunpack.c.l.b16 %v946
        %v1235 = vunpack.c.l.b16 %v947
        %v1236 = vunpack.c.l.b16 %v948
        %v1237 = vunpack.c.l.b16 %v949
        %v1238 = vunpack.c.l.b16 %v950
        %v1239 = vunpack.c.l.b16 %v951
        %v1240 = vunpack.c.l.b16 %v952
        %v1241 = vunpack.c.l.b16 %v953
        %v1242 = vunpack.c.l.b16 %v954
        %v1243 = vunpack.c.l.b16 %v955
        %v1244 = vunpack.c.l.b16 %v956
        %v1245 = vunpack.c.l.b16 %v957
        %v1246 = vunpack.c.l.b16 %v958
        %v1247 = vunpack.c.l.b16 %v959
        %v1248 = vunpack.c.l.b16 %v960
        %v1249 = vunpack.c.l.b16 %v961
        %v1250 = vunpack.c.l.b16 %v962
        %v1251 = vunpack.c.l.b16 %v963
        %v1252 = vunpack.c.l.b16 %v964
        %v1253 = vpack.c.b16 %v1110, %v1109
        %v1254 = vpack.c.b16 %v1112, %v1111
        %v1255 = vpack.c.b16 %v1114, %v1113
        %v1256 = vpack.c.b16 %v1116, %v1115
        %v1257 = vpack.c.b16 %v1118, %v1117
        %v1258 = vpack.c.b16 %v1120, %v1119
        %v1259 = vpack.c.b16 %v1122, %v1121
        %v1260 = vpack.c.b16 %v1124, %v1123
        %v1261 = vpack.c.b16 %v1126, %v1125
        %v1262 = vpack.c.b16 %v1128, %v1127
        %v1263 = vpack.c.b16 %v1130, %v1129
        %v1264 = vpack.c.b16 %v1132, %v1131
        %v1265 = vpack.c.b16 %v1134, %v1133
        %v1266 = vpack.c.b16 %v1136, %v1135
        %v1267 = vpack.c.b16 %v1138, %v1137
        %v1268 = vpack.c.b16 %v1140, %v1139
        %v1269 = vpack.c.b16 %v1142, %v1141
        %v1270 = vpack.c.b16 %v1144, %v1143
        %v1271 = vpack.c.b16 %v1146, %v1145
        %v1272 = vpack.c.b16 %v1148, %v1147
        %v1273 = vpack.c.b16 %v1150, %v1149
        %v1274 = vpack.c.b16 %v1152, %v1151
        %v1275 = vpack.c.b16 %v1154, %v1153
        %v1276 = vpack.c.b16 %v1156, %v1155
        %v1277 = vpack.c.b16 %v1158, %v1157
        %v1278 = vpack.c.b16 %v1160, %v1159
        %v1279 = vpack.c.b16 %v1162, %v1161
        %v1280 = vpack.c.b16 %v1164, %v1163
        %v1281 = vpack.c.b16 %v1166, %v1165
        %v1282 = vpack.c.b16 %v1168, %v1167
        %v1283 = vpack.c.b16 %v1170, %v1169
        %v1284 = vpack.c.b16 %v1172, %v1171
        %v1285 = vpack.c.b16 %v1174, %v1173
        %v1286 = vpack.c.b16 %v1176, %v1175
        %v1287 = vpack.c.b16 %v1178, %v1177
        %v1288 = vpack.c.b16 %v1180, %v1179
        %v1289 = vpack.c.b16 %v1182, %v1181
        %v1290 = vpack.c.b16 %v1184, %v1183
        %v1291 = vpack.c.b16 %v1186, %v1185
        %v1292 = vpack.c.b16 %v1188, %v1187
        %v1293 = vpack.c.b16 %v1190, %v1189
        %v1294 = vpack.c.b16 %v1192, %v1191
        %v1295 = vpack.c.b16 %v1194, %v1193
        %v1296 = vpack.c.b16 %v1196, %v1195
        %v1297 = vpack.c.b16 %v1198, %v1197
        %v1298 = vpack.c.b16 %v1200, %v1199
        %v1299 = vpack.c.b16 %v1202, %v1201
        %v1300 = vpack.c.b16 %v1204, %v1203
        %v1301 = vpack.c.b16 %v1206, %v1205
        %v1302 = vpack.c.b16 %v1208, %v1207
        %v1303 = vpack.c.b16 %v1210, %v1209
        %v1304 = vpack.c.b16 %v1212, %v1211
        %v1305 = vpack.c.b16 %v1214, %v1213
        %v1306 = vpack.c.b16 %v1216, %v1215
        %v1307 = vpack.c.b16 %v1218, %v1217
        %v1308 = vpack.c.b16 %v1220, %v1219
        %v1309 = vpack.c.b16 %v1222, %v1221
        %v1310 = vpack.c.b16 %v1224, %v1223
        %v1311 = vpack.c.b16 %v1226, %v1225
        %v1312 = vpack.c.b16 %v1228, %v1227
        %v1313 = vpack.c.b16 %v1230, %v1229
        %v1314 = vpack.c.b16 %v1232, %v1231
        %v1315 = vpack.c.b16 %v1234, %v1233
        %v1316 = vpack.c.b16 %v1236, %v1235
        %v1317 = vpack.c.b16 %v1238, %v1237
        %v1318 = vpack.c.b16 %v1240, %v1239
        %v1319 = vpack.c.b16 %v1242, %v1241
        %v1320 = vpack.c.b16 %v1244, %v1243
        %v1321 = vpack.c.b16 %v1246, %v1245
        %v1322 = vpack.c.b16 %v1248, %v1247
        %v1323 = vpack.c.b16 %v1250, %v1249
        %v1324 = vpack.c.b16 %v1252, %v1251
        %1397 = vmatprep.subr.bf16.mxu0 0
        %1398 = vmatpush1.bf16.msra.mxu0 %v1253
        %1399 = vmatprep.subr.bf16.mxu0 0
        %1400 = vmatpush1.bf16.msra.mxu0 %v1254
        %1401 = vmatprep.subr.bf16.mxu0 0
        %1402 = vmatpush1.bf16.msra.mxu0 %v1255
        %1403 = vmatprep.subr.bf16.mxu0 0
        %1404 = vmatpush1.bf16.msra.mxu0 %v1256
        %1405 = vmatprep.subr.bf16.mxu0 0
        %1406 = vmatpush1.bf16.msra.mxu0 %v1257
        %1407 = vmatprep.subr.bf16.mxu0 0
        %1408 = vmatpush1.bf16.msra.mxu0 %v1258
        %1409 = vmatprep.subr.bf16.mxu0 0
        %1410 = vmatpush1.bf16.msra.mxu0 %v1259
        %1411 = vmatprep.subr.bf16.mxu0 0
        %1412 = vmatpush1.bf16.msra.mxu0 %v1260
        %1413 = vmatprep.subr.bf16.mxu0 0
        %1414 = vmatpush1.bf16.msra.mxu0 %v1261
        %1415 = vmatprep.subr.bf16.mxu0 0
        %1416 = vmatpush1.bf16.msra.mxu0 %v1262
        %1417 = vmatprep.subr.bf16.mxu0 0
        %1418 = vmatpush1.bf16.msra.mxu0 %v1263
        %1419 = vmatprep.subr.bf16.mxu0 0
        %1420 = vmatpush1.bf16.msra.mxu0 %v1264
        %1421 = vmatprep.subr.bf16.mxu0 0
        %1422 = vmatpush1.bf16.msra.mxu0 %v1265
        %1423 = vmatprep.subr.bf16.mxu0 0
        %1424 = vmatpush1.bf16.msra.mxu0 %v1266
        %1425 = vmatprep.subr.bf16.mxu0 0
        %1426 = vmatpush1.bf16.msra.mxu0 %v1267
        %1427 = vmatprep.subr.bf16.mxu0 0
        %1428 = vmatpush1.bf16.msra.mxu0 %v1268
        %1429 = vmatprep.mubr.bf16.mxu0 %v768
        %1430 = vmatmul.mubr.bf16.gmra.mrb[0].mxu0 %v767
        %v1431 = vpop.f32.mrb[0].mxu0
        %v1432 = vadd.f32 0.0, %v1431
        %v1433 = vpop.f32.mrb[0].mxu0
        %v1434 = vpop.f32.mrb[0].mxu0
        %v1435 = vadd.f32 0.0, %v1434
        %v1436 = vpop.f32.mrb[0].mxu0
        %1437 = vmatprep.mubr.bf16.mxu0 %v771
        %1438 = vmatmul.mubr.bf16.gmra.mrb[0].mxu0 %v770
        %v1439 = vpop.f32.mrb[0].mxu0
        %v1440 = vadd.f32 0.0, %v1439
        %v1441 = vpop.f32.mrb[0].mxu0
        %v1442 = vpop.f32.mrb[0].mxu0
        %v1443 = vadd.f32 0.0, %v1442
        %v1444 = vpop.f32.mrb[0].mxu0
        %1445 = vmatprep.mubr.bf16.mxu0 %v774
        %1446 = vmatmul.mubr.bf16.gmra.mrb[0].mxu0 %v773
        %v1447 = vpop.f32.mrb[0].mxu0
        %v1448 = vadd.f32 0.0, %v1447
        %v1449 = vpop.f32.mrb[0].mxu0
        %v1450 = vpop.f32.mrb[0].mxu0
        %v1451 = vadd.f32 0.0, %v1450
        %v1452 = vpop.f32.mrb[0].mxu0
        %1453 = vmatprep.mubr.bf16.mxu0 %v777
        %1454 = vmatmul.mubr.bf16.gmra.mrb[0].mxu0 %v776
        %v1455 = vpop.f32.mrb[0].mxu0
        %v1456 = vadd.f32 0.0, %v1455
        %v1457 = vpop.f32.mrb[0].mxu0
        %v1458 = vpop.f32.mrb[0].mxu0
        %v1459 = vadd.f32 0.0, %v1458
        %v1460 = vpop.f32.mrb[0].mxu0
        %1461 = vmatprep.mubr.bf16.mxu0 %v780
        %1462 = vmatmul.mubr.bf16.gmra.mrb[0].mxu0 %v779
        %v1463 = vpop.f32.mrb[0].mxu0
        %v1464 = vadd.f32 0.0, %v1463
        %v1465 = vpop.f32.mrb[0].mxu0
        %v1466 = vpop.f32.mrb[0].mxu0
        %v1467 = vadd.f32 0.0, %v1466
        %v1468 = vpop.f32.mrb[0].mxu0
        %1469 = vmatprep.mubr.bf16.mxu0 %v783
        %1470 = vmatmul.mubr.bf16.gmra.mrb[0].mxu0 %v782
        %v1471 = vpop.f32.mrb[0].mxu0
        %v1472 = vadd.f32 0.0, %v1471
        %v1473 = vpop.f32.mrb[0].mxu0
        %v1474 = vpop.f32.mrb[0].mxu0
        %v1475 = vadd.f32 0.0, %v1474
        %v1476 = vpop.f32.mrb[0].mxu0
        %1477 = vmatprep.mubr.bf16.mxu0 %v786
        %1478 = vmatmul.mubr.bf16.gmra.mrb[0].mxu0 %v785
        %v1479 = vpop.f32.mrb[0].mxu0
        %v1480 = vadd.f32 0.0, %v1479
        %v1481 = vpop.f32.mrb[0].mxu0
        %v1482 = vpop.f32.mrb[0].mxu0
        %v1483 = vadd.f32 0.0, %v1482
        %v1484 = vpop.f32.mrb[0].mxu0
        %1485 = vmatprep.mubr.bf16.mxu0 %v789
        %1486 = vmatmul.mubr.bf16.gmra.mrb[0].mxu0 %v788
        %v1487 = vpop.f32.mrb[0].mxu0
        %v1488 = vadd.f32 0.0, %v1487
        %v1489 = vpop.f32.mrb[0].mxu0
        %v1490 = vpop.f32.mrb[0].mxu0
        %v1491 = vadd.f32 0.0, %v1490
        %v1492 = vpop.f32.mrb[0].mxu0
        %1493 = vmatprep.mubr.bf16.mxu0 %v792
        %1494 = vmatmul.mubr.bf16.gmra.mrb[0].mxu0 %v791
        %v1495 = vpop.f32.mrb[0].mxu0
        %v1496 = vadd.f32 0.0, %v1495
        %v1497 = vpop.f32.mrb[0].mxu0
        %v1498 = vpop.f32.mrb[0].mxu0
        %v1499 = vadd.f32 0.0, %v1498
        %v1500 = vpop.f32.mrb[0].mxu0
        %1501 = vmatprep.mubr.bf16.mxu0 %v795
        %1502 = vmatmul.mubr.bf16.gmra.mrb[0].mxu0 %v794
        %v1503 = vpop.f32.mrb[0].mxu0
        %v1504 = vadd.f32 0.0, %v1503
        %v1505 = vpop.f32.mrb[0].mxu0
        %v1506 = vpop.f32.mrb[0].mxu0
        %v1507 = vadd.f32 0.0, %v1506
        %v1508 = vpop.f32.mrb[0].mxu0
        %1509 = vmatprep.mubr.bf16.mxu0 %v798
        %1510 = vmatmul.mubr.bf16.gmra.mrb[0].mxu0 %v797
        %v1511 = vpop.f32.mrb[0].mxu0
        %v1512 = vadd.f32 0.0, %v1511
        %v1513 = vpop.f32.mrb[0].mxu0
        %v1514 = vpop.f32.mrb[0].mxu0
        %v1515 = vadd.f32 0.0, %v1514
        %v1516 = vpop.f32.mrb[0].mxu0
        %1517 = vmatprep.mubr.bf16.mxu0 %v801
        %1518 = vmatmul.mubr.bf16.gmra.mrb[0].mxu0 %v800
        %v1519 = vpop.f32.mrb[0].mxu0
        %v1520 = vadd.f32 0.0, %v1519
        %v1521 = vpop.f32.mrb[0].mxu0
        %v1522 = vpop.f32.mrb[0].mxu0
        %v1523 = vadd.f32 0.0, %v1522
        %v1524 = vpop.f32.mrb[0].mxu0
        %1525 = vmatprep.mubr.bf16.mxu0 %v804
        %1526 = vmatmul.mubr.bf16.gmra.mrb[0].mxu0 %v803
        %v1527 = vpop.f32.mrb[0].mxu0
        %v1528 = vadd.f32 0.0, %v1527
        %v1529 = vpop.f32.mrb[0].mxu0
        %v1530 = vpop.f32.mrb[0].mxu0
        %v1531 = vadd.f32 0.0, %v1530
        %v1532 = vpop.f32.mrb[0].mxu0
        %1533 = vmatprep.mubr.bf16.mxu0 %v807
        %1534 = vmatmul.mubr.bf16.gmra.mrb[0].mxu0 %v806
        %v1535 = vpop.f32.mrb[0].mxu0
        %v1536 = vadd.f32 0.0, %v1535
        %v1537 = vpop.f32.mrb[0].mxu0
        %v1538 = vpop.f32.mrb[0].mxu0
        %v1539 = vadd.f32 0.0, %v1538
        %v1540 = vpop.f32.mrb[0].mxu0
        %1541 = vmatprep.mubr.bf16.mxu0 %v810
        %1542 = vmatmul.mubr.bf16.gmra.mrb[0].mxu0 %v809
        %v1543 = vpop.f32.mrb[0].mxu0
        %v1544 = vadd.f32 0.0, %v1543
        %v1545 = vpop.f32.mrb[0].mxu0
        %v1546 = vpop.f32.mrb[0].mxu0
        %v1547 = vadd.f32 0.0, %v1546
        %v1548 = vpop.f32.mrb[0].mxu0
        %1549 = vmatprep.mubr.bf16.mxu0 %v813
        %1550 = vmatmul.mubr.bf16.gmra.mrb[0].mxu0 %v812
        %v1551 = vpop.f32.mrb[0].mxu0
        %v1552 = vadd.f32 0.0, %v1551
        %v1553 = vpop.f32.mrb[0].mxu0
        %v1554 = vpop.f32.mrb[0].mxu0
        %v1555 = vadd.f32 0.0, %v1554
        %v1556 = vpop.f32.mrb[0].mxu0
        %1557 = vdwg.mxu0
        %1558 = vmatprep.subr.bf16.mxu0 0
        %1559 = vmatpush1.bf16.msra.mxu0 %v1269
        %1560 = vmatprep.subr.bf16.mxu0 0
        %1561 = vmatpush1.bf16.msra.mxu0 %v1270
        %1562 = vmatprep.subr.bf16.mxu0 0
        %1563 = vmatpush1.bf16.msra.mxu0 %v1271
        %1564 = vmatprep.subr.bf16.mxu0 0
        %1565 = vmatpush1.bf16.msra.mxu0 %v1272
        %1566 = vmatprep.subr.bf16.mxu0 0
        %1567 = vmatpush1.bf16.msra.mxu0 %v1273
        %1568 = vmatprep.subr.bf16.mxu0 0
        %1569 = vmatpush1.bf16.msra.mxu0 %v1274
        %1570 = vmatprep.subr.bf16.mxu0 0
        %1571 = vmatpush1.bf16.msra.mxu0 %v1275
        %1572 = vmatprep.subr.bf16.mxu0 0
        %1573 = vmatpush1.bf16.msra.mxu0 %v1276
        %1574 = vmatprep.subr.bf16.mxu0 0
        %1575 = vmatpush1.bf16.msra.mxu0 %v1277
        %1576 = vmatprep.subr.bf16.mxu0 0
        %1577 = vmatpush1.bf16.msra.mxu0 %v1278
        %1578 = vmatprep.subr.bf16.mxu0 0
        %1579 = vmatpush1.bf16.msra.mxu0 %v1279
        %1580 = vmatprep.subr.bf16.mxu0 0
        %1581 = vmatpush1.bf16.msra.mxu0 %v1280
        %1582 = vmatprep.subr.bf16.mxu0 0
        %1583 = vmatpush1.bf16.msra.mxu0 %v1281
        %1584 = vmatprep.subr.bf16.mxu0 0
        %1585 = vmatpush1.bf16.msra.mxu0 %v1282
        %1586 = vmatprep.subr.bf16.mxu0 0
        %1587 = vmatpush1.bf16.msra.mxu0 %v1283
        %1588 = vmatprep.subr.bf16.mxu0 0
        %1589 = vmatpush1.bf16.msra.mxu0 %v1284
        %1590 = vmatprep.mubr.bf16.mxu0 %v770
        %1591 = vmatmul.mubr.bf16.gmra.mrb[0].mxu0 %v769
        %v1592 = vpop.f32.mrb[0].mxu0
        %v1593 = vadd.f32 %v1432, %v1592
        %v1594 = vpop.f32.mrb[0].mxu0
        %v1595 = vpop.f32.mrb[0].mxu0
        %v1596 = vadd.f32 %v1435, %v1595
        %v1597 = vpop.f32.mrb[0].mxu0
        %1598 = vmatprep.mubr.bf16.mxu0 %v773
        %1599 = vmatmul.mubr.bf16.gmra.mrb[0].mxu0 %v772
        %v1600 = vpop.f32.mrb[0].mxu0
        %v1601 = vadd.f32 %v1440, %v1600
        %v1602 = vpop.f32.mrb[0].mxu0
        %v1603 = vpop.f32.mrb[0].mxu0
        %v1604 = vadd.f32 %v1443, %v1603
        %v1605 = vpop.f32.mrb[0].mxu0
        %1606 = vmatprep.mubr.bf16.mxu0 %v776
        %1607 = vmatmul.mubr.bf16.gmra.mrb[0].mxu0 %v775
        %v1608 = vpop.f32.mrb[0].mxu0
        %v1609 = vadd.f32 %v1448, %v1608
        %v1610 = vpop.f32.mrb[0].mxu0
        %v1611 = vpop.f32.mrb[0].mxu0
        %v1612 = vadd.f32 %v1451, %v1611
        %v1613 = vpop.f32.mrb[0].mxu0
        %1614 = vmatprep.mubr.bf16.mxu0 %v779
        %1615 = vmatmul.mubr.bf16.gmra.mrb[0].mxu0 %v778
        %v1616 = vpop.f32.mrb[0].mxu0
        %v1617 = vadd.f32 %v1456, %v1616
        %v1618 = vpop.f32.mrb[0].mxu0
        %v1619 = vpop.f32.mrb[0].mxu0
        %v1620 = vadd.f32 %v1459, %v1619
        %v1621 = vpop.f32.mrb[0].mxu0
        %1622 = vmatprep.mubr.bf16.mxu0 %v782
        %1623 = vmatmul.mubr.bf16.gmra.mrb[0].mxu0 %v781
        %v1624 = vpop.f32.mrb[0].mxu0
        %v1625 = vadd.f32 %v1464, %v1624
        %v1626 = vpop.f32.mrb[0].mxu0
        %v1627 = vpop.f32.mrb[0].mxu0
        %v1628 = vadd.f32 %v1467, %v1627
        %v1629 = vpop.f32.mrb[0].mxu0
        %1630 = vmatprep.mubr.bf16.mxu0 %v785
        %1631 = vmatmul.mubr.bf16.gmra.mrb[0].mxu0 %v784
        %v1632 = vpop.f32.mrb[0].mxu0
        %v1633 = vadd.f32 %v1472, %v1632
        %v1634 = vpop.f32.mrb[0].mxu0
        %v1635 = vpop.f32.mrb[0].mxu0
        %v1636 = vadd.f32 %v1475, %v1635
        %v1637 = vpop.f32.mrb[0].mxu0
        %1638 = vmatprep.mubr.bf16.mxu0 %v788
        %1639 = vmatmul.mubr.bf16.gmra.mrb[0].mxu0 %v787
        %v1640 = vpop.f32.mrb[0].mxu0
        %v1641 = vadd.f32 %v1480, %v1640
        %v1642 = vpop.f32.mrb[0].mxu0
        %v1643 = vpop.f32.mrb[0].mxu0
        %v1644 = vadd.f32 %v1483, %v1643
        %v1645 = vpop.f32.mrb[0].mxu0
        %1646 = vmatprep.mubr.bf16.mxu0 %v791
        %1647 = vmatmul.mubr.bf16.gmra.mrb[0].mxu0 %v790
        %v1648 = vpop.f32.mrb[0].mxu0
        %v1649 = vadd.f32 %v1488, %v1648
        %v1650 = vpop.f32.mrb[0].mxu0
        %v1651 = vpop.f32.mrb[0].mxu0
        %v1652 = vadd.f32 %v1491, %v1651
        %v1653 = vpop.f32.mrb[0].mxu0
        %1654 = vmatprep.mubr.bf16.mxu0 %v794
        %1655 = vmatmul.mubr.bf16.gmra.mrb[0].mxu0 %v793
        %v1656 = vpop.f32.mrb[0].mxu0
        %v1657 = vadd.f32 %v1496, %v1656
        %v1658 = vpop.f32.mrb[0].mxu0
        %v1659 = vpop.f32.mrb[0].mxu0
        %v1660 = vadd.f32 %v1499, %v1659
        %v1661 = vpop.f32.mrb[0].mxu0
        %1662 = vmatprep.mubr.bf16.mxu0 %v797
        %1663 = vmatmul.mubr.bf16.gmra.mrb[0].mxu0 %v796
        %v1664 = vpop.f32.mrb[0].mxu0
        %v1665 = vadd.f32 %v1504, %v1664
        %v1666 = vpop.f32.mrb[0].mxu0
        %v1667 = vpop.f32.mrb[0].mxu0
        %v1668 = vadd.f32 %v1507, %v1667
        %v1669 = vpop.f32.mrb[0].mxu0
        %1670 = vmatprep.mubr.bf16.mxu0 %v800
        %1671 = vmatmul.mubr.bf16.gmra.mrb[0].mxu0 %v799
        %v1672 = vpop.f32.mrb[0].mxu0
        %v1673 = vadd.f32 %v1512, %v1672
        %v1674 = vpop.f32.mrb[0].mxu0
        %v1675 = vpop.f32.mrb[0].mxu0
        %v1676 = vadd.f32 %v1515, %v1675
        %v1677 = vpop.f32.mrb[0].mxu0
        %1678 = vmatprep.mubr.bf16.mxu0 %v803
        %1679 = vmatmul.mubr.bf16.gmra.mrb[0].mxu0 %v802
        %v1680 = vpop.f32.mrb[0].mxu0
        %v1681 = vadd.f32 %v1520, %v1680
        %v1682 = vpop.f32.mrb[0].mxu0
        %v1683 = vpop.f32.mrb[0].mxu0
        %v1684 = vadd.f32 %v1523, %v1683
        %v1685 = vpop.f32.mrb[0].mxu0
        %1686 = vmatprep.mubr.bf16.mxu0 %v806
        %1687 = vmatmul.mubr.bf16.gmra.mrb[0].mxu0 %v805
        %v1688 = vpop.f32.mrb[0].mxu0
        %v1689 = vadd.f32 %v1528, %v1688
        %v1690 = vpop.f32.mrb[0].mxu0
        %v1691 = vpop.f32.mrb[0].mxu0
        %v1692 = vadd.f32 %v1531, %v1691
        %v1693 = vpop.f32.mrb[0].mxu0
        %1694 = vmatprep.mubr.bf16.mxu0 %v809
        %1695 = vmatmul.mubr.bf16.gmra.mrb[0].mxu0 %v808
        %v1696 = vpop.f32.mrb[0].mxu0
        %v1697 = vadd.f32 %v1536, %v1696
        %v1698 = vpop.f32.mrb[0].mxu0
        %v1699 = vpop.f32.mrb[0].mxu0
        %v1700 = vadd.f32 %v1539, %v1699
        %v1701 = vpop.f32.mrb[0].mxu0
        %1702 = vmatprep.mubr.bf16.mxu0 %v812
        %1703 = vmatmul.mubr.bf16.gmra.mrb[0].mxu0 %v811
        %v1704 = vpop.f32.mrb[0].mxu0
        %v1705 = vadd.f32 %v1544, %v1704
        %v1706 = vpop.f32.mrb[0].mxu0
        %v1707 = vpop.f32.mrb[0].mxu0
        %v1708 = vadd.f32 %v1547, %v1707
        %v1709 = vpop.f32.mrb[0].mxu0
        %1710 = vmatprep.mubr.bf16.mxu0 %v815
        %1711 = vmatmul.mubr.bf16.gmra.mrb[0].mxu0 %v814
        %v1712 = vpop.f32.mrb[0].mxu0
        %v1713 = vadd.f32 %v1552, %v1712
        %v1714 = vpop.f32.mrb[0].mxu0
        %v1715 = vpop.f32.mrb[0].mxu0
        %v1716 = vadd.f32 %v1555, %v1715
        %v1717 = vpop.f32.mrb[0].mxu0
        %1718 = vdwg.mxu0
        %1719 = vmatprep.subr.bf16.mxu0 0
        %1720 = vmatpush1.bf16.msra.mxu0 %v1285
        %1721 = vmatprep.subr.bf16.mxu0 0
        %1722 = vmatpush1.bf16.msra.mxu0 %v1286
        %1723 = vmatprep.subr.bf16.mxu0 0
        %1724 = vmatpush1.bf16.msra.mxu0 %v1287
        %1725 = vmatprep.subr.bf16.mxu0 0
        %1726 = vmatpush1.bf16.msra.mxu0 %v1288
        %1727 = vmatprep.subr.bf16.mxu0 0
        %1728 = vmatpush1.bf16.msra.mxu0 %v1289
        %1729 = vmatprep.subr.bf16.mxu0 0
        %1730 = vmatpush1.bf16.msra.mxu0 %v1290
        %1731 = vmatprep.subr.bf16.mxu0 0
        %1732 = vmatpush1.bf16.msra.mxu0 %v1291
        %1733 = vmatprep.subr.bf16.mxu0 0
        %1734 = vmatpush1.bf16.msra.mxu0 %v1292
        %1735 = vmatprep.subr.bf16.mxu0 0
        %1736 = vmatpush1.bf16.msra.mxu0 %v1293
        %1737 = vmatprep.subr.bf16.mxu0 0
        %1738 = vmatpush1.bf16.msra.mxu0 %v1294
        %1739 = vmatprep.subr.bf16.mxu0 0
        %1740 = vmatpush1.bf16.msra.mxu0 %v1295
        %1741 = vmatprep.subr.bf16.mxu0 0
        %1742 = vmatpush1.bf16.msra.mxu0 %v1296
        %1743 = vmatprep.subr.bf16.mxu0 0
        %1744 = vmatpush1.bf16.msra.mxu0 %v1297
        %1745 = vmatprep.subr.bf16.mxu0 0
        %1746 = vmatpush1.bf16.msra.mxu0 %v1298
        %1747 = vmatprep.subr.bf16.mxu0 0
        %1748 = vmatpush1.bf16.msra.mxu0 %v1299
        %1749 = vmatprep.subr.bf16.mxu0 0
        %1750 = vmatpush1.bf16.msra.mxu0 %v1300
        %1751 = vmatprep.mubr.bf16.mxu0 %v772
        %1752 = vmatmul.mubr.bf16.gmra.mrb[0].mxu0 %v771
        %v1753 = vpop.f32.mrb[0].mxu0
        %v1754 = vadd.f32 %v1593, %v1753
        %v1755 = vpop.f32.mrb[0].mxu0
        %v1756 = vpop.f32.mrb[0].mxu0
        %v1757 = vadd.f32 %v1596, %v1756
        %v1758 = vpop.f32.mrb[0].mxu0
        %1759 = vmatprep.mubr.bf16.mxu0 %v775
        %1760 = vmatmul.mubr.bf16.gmra.mrb[0].mxu0 %v774
        %v1761 = vpop.f32.mrb[0].mxu0
        %v1762 = vadd.f32 %v1601, %v1761
        %v1763 = vpop.f32.mrb[0].mxu0
        %v1764 = vpop.f32.mrb[0].mxu0
        %v1765 = vadd.f32 %v1604, %v1764
        %v1766 = vpop.f32.mrb[0].mxu0
        %1767 = vmatprep.mubr.bf16.mxu0 %v778
        %1768 = vmatmul.mubr.bf16.gmra.mrb[0].mxu0 %v777
        %v1769 = vpop.f32.mrb[0].mxu0
        %v1770 = vadd.f32 %v1609, %v1769
        %v1771 = vpop.f32.mrb[0].mxu0
        %v1772 = vpop.f32.mrb[0].mxu0
        %v1773 = vadd.f32 %v1612, %v1772
        %v1774 = vpop.f32.mrb[0].mxu0
        %1775 = vmatprep.mubr.bf16.mxu0 %v781
        %1776 = vmatmul.mubr.bf16.gmra.mrb[0].mxu0 %v780
        %v1777 = vpop.f32.mrb[0].mxu0
        %v1778 = vadd.f32 %v1617, %v1777
        %v1779 = vpop.f32.mrb[0].mxu0
        %v1780 = vpop.f32.mrb[0].mxu0
        %v1781 = vadd.f32 %v1620, %v1780
        %v1782 = vpop.f32.mrb[0].mxu0
        %1783 = vmatprep.mubr.bf16.mxu0 %v784
        %1784 = vmatmul.mubr.bf16.gmra.mrb[0].mxu0 %v783
        %v1785 = vpop.f32.mrb[0].mxu0
        %v1786 = vadd.f32 %v1625, %v1785
        %v1787 = vpop.f32.mrb[0].mxu0
        %v1788 = vpop.f32.mrb[0].mxu0
        %v1789 = vadd.f32 %v1628, %v1788
        %v1790 = vpop.f32.mrb[0].mxu0
        %1791 = vmatprep.mubr.bf16.mxu0 %v787
        %1792 = vmatmul.mubr.bf16.gmra.mrb[0].mxu0 %v786
        %v1793 = vpop.f32.mrb[0].mxu0
        %v1794 = vadd.f32 %v1633, %v1793
        %v1795 = vpop.f32.mrb[0].mxu0
        %v1796 = vpop.f32.mrb[0].mxu0
        %v1797 = vadd.f32 %v1636, %v1796
        %v1798 = vpop.f32.mrb[0].mxu0
        %1799 = vmatprep.mubr.bf16.mxu0 %v790
        %1800 = vmatmul.mubr.bf16.gmra.mrb[0].mxu0 %v789
        %v1801 = vpop.f32.mrb[0].mxu0
        %v1802 = vadd.f32 %v1641, %v1801
        %v1803 = vpop.f32.mrb[0].mxu0
        %v1804 = vpop.f32.mrb[0].mxu0
        %v1805 = vadd.f32 %v1644, %v1804
        %v1806 = vpop.f32.mrb[0].mxu0
        %1807 = vmatprep.mubr.bf16.mxu0 %v793
        %1808 = vmatmul.mubr.bf16.gmra.mrb[0].mxu0 %v792
        %v1809 = vpop.f32.mrb[0].mxu0
        %v1810 = vadd.f32 %v1649, %v1809
        %v1811 = vpop.f32.mrb[0].mxu0
        %v1812 = vpop.f32.mrb[0].mxu0
        %v1813 = vadd.f32 %v1652, %v1812
        %v1814 = vpop.f32.mrb[0].mxu0
        %1815 = vmatprep.mubr.bf16.mxu0 %v796
        %1816 = vmatmul.mubr.bf16.gmra.mrb[0].mxu0 %v795
        %v1817 = vpop.f32.mrb[0].mxu0
        %v1818 = vadd.f32 %v1657, %v1817
        %v1819 = vpop.f32.mrb[0].mxu0
        %v1820 = vpop.f32.mrb[0].mxu0
        %v1821 = vadd.f32 %v1660, %v1820
        %v1822 = vpop.f32.mrb[0].mxu0
        %1823 = vmatprep.mubr.bf16.mxu0 %v799
        %1824 = vmatmul.mubr.bf16.gmra.mrb[0].mxu0 %v798
        %v1825 = vpop.f32.mrb[0].mxu0
        %v1826 = vadd.f32 %v1665, %v1825
        %v1827 = vpop.f32.mrb[0].mxu0
        %v1828 = vpop.f32.mrb[0].mxu0
        %v1829 = vadd.f32 %v1668, %v1828
        %v1830 = vpop.f32.mrb[0].mxu0
        %1831 = vmatprep.mubr.bf16.mxu0 %v802
        %1832 = vmatmul.mubr.bf16.gmra.mrb[0].mxu0 %v801
        %v1833 = vpop.f32.mrb[0].mxu0
        %v1834 = vadd.f32 %v1673, %v1833
        %v1835 = vpop.f32.mrb[0].mxu0
        %v1836 = vpop.f32.mrb[0].mxu0
        %v1837 = vadd.f32 %v1676, %v1836
        %v1838 = vpop.f32.mrb[0].mxu0
        %1839 = vmatprep.mubr.bf16.mxu0 %v805
        %1840 = vmatmul.mubr.bf16.gmra.mrb[0].mxu0 %v804
        %v1841 = vpop.f32.mrb[0].mxu0
        %v1842 = vadd.f32 %v1681, %v1841
        %v1843 = vpop.f32.mrb[0].mxu0
        %v1844 = vpop.f32.mrb[0].mxu0
        %v1845 = vadd.f32 %v1684, %v1844
        %v1846 = vpop.f32.mrb[0].mxu0
        %1847 = vmatprep.mubr.bf16.mxu0 %v808
        %1848 = vmatmul.mubr.bf16.gmra.mrb[0].mxu0 %v807
        %v1849 = vpop.f32.mrb[0].mxu0
        %v1850 = vadd.f32 %v1689, %v1849
        %v1851 = vpop.f32.mrb[0].mxu0
        %v1852 = vpop.f32.mrb[0].mxu0
        %v1853 = vadd.f32 %v1692, %v1852
        %v1854 = vpop.f32.mrb[0].mxu0
        %1855 = vmatprep.mubr.bf16.mxu0 %v811
        %1856 = vmatmul.mubr.bf16.gmra.mrb[0].mxu0 %v810
        %v1857 = vpop.f32.mrb[0].mxu0
        %v1858 = vadd.f32 %v1697, %v1857
        %v1859 = vpop.f32.mrb[0].mxu0
        %v1860 = vpop.f32.mrb[0].mxu0
        %v1861 = vadd.f32 %v1700, %v1860
        %v1862 = vpop.f32.mrb[0].mxu0
        %1863 = vmatprep.mubr.bf16.mxu0 %v814
        %1864 = vmatmul.mubr.bf16.gmra.mrb[0].mxu0 %v813
        %v1865 = vpop.f32.mrb[0].mxu0
        %v1866 = vadd.f32 %v1705, %v1865
        %v1867 = vpop.f32.mrb[0].mxu0
        %v1868 = vpop.f32.mrb[0].mxu0
        %v1869 = vadd.f32 %v1708, %v1868
        %v1870 = vpop.f32.mrb[0].mxu0
        %1871 = vmatprep.mubr.bf16.mxu0 %v817
        %1872 = vmatmul.mubr.bf16.gmra.mrb[0].mxu0 %v816
        %v1873 = vpop.f32.mrb[0].mxu0
        %v1874 = vadd.f32 %v1713, %v1873
        %v1875 = vpop.f32.mrb[0].mxu0
        %v1876 = vpop.f32.mrb[0].mxu0
        %v1877 = vadd.f32 %v1716, %v1876
        %v1878 = vpop.f32.mrb[0].mxu0
        %1879 = vdwg.mxu0
        %1880 = vmatprep.subr.bf16.mxu0 0
        %1881 = vmatpush1.bf16.msra.mxu0 %v1301
        %1882 = vmatprep.subr.bf16.mxu0 0
        %1883 = vmatpush1.bf16.msra.mxu0 %v1302
        %1884 = vmatprep.subr.bf16.mxu0 0
        %1885 = vmatpush1.bf16.msra.mxu0 %v1303
        %1886 = vmatprep.subr.bf16.mxu0 0
        %1887 = vmatpush1.bf16.msra.mxu0 %v1304
        %1888 = vmatprep.subr.bf16.mxu0 0
        %1889 = vmatpush1.bf16.msra.mxu0 %v1305
        %1890 = vmatprep.subr.bf16.mxu0 0
        %1891 = vmatpush1.bf16.msra.mxu0 %v1306
        %1892 = vmatprep.subr.bf16.mxu0 0
        %1893 = vmatpush1.bf16.msra.mxu0 %v1307
        %1894 = vmatprep.subr.bf16.mxu0 0
        %1895 = vmatpush1.bf16.msra.mxu0 %v1308
        %1896 = vmatprep.subr.bf16.mxu0 0
        %1897 = vmatpush1.bf16.msra.mxu0 %v1309
        %1898 = vmatprep.subr.bf16.mxu0 0
        %1899 = vmatpush1.bf16.msra.mxu0 %v1310
        %1900 = vmatprep.subr.bf16.mxu0 0
        %1901 = vmatpush1.bf16.msra.mxu0 %v1311
        %1902 = vmatprep.subr.bf16.mxu0 0
        %1903 = vmatpush1.bf16.msra.mxu0 %v1312
        %1904 = vmatprep.subr.bf16.mxu0 0
        %1905 = vmatpush1.bf16.msra.mxu0 %v1313
        %1906 = vmatprep.subr.bf16.mxu0 0
        %1907 = vmatpush1.bf16.msra.mxu0 %v1314
        %1908 = vmatprep.subr.bf16.mxu0 0
        %1909 = vmatpush1.bf16.msra.mxu0 %v1315
        %1910 = vmatprep.subr.bf16.mxu0 0
        %1911 = vmatpush1.bf16.msra.mxu0 %v1316
        %1912 = vmatprep.mubr.bf16.mxu0 %v774
        %1913 = vmatmul.mubr.bf16.gmra.mrb[0].mxu0 %v773
        %v1914 = vpop.f32.mrb[0].mxu0
        %v1915 = vadd.f32 %v1754, %v1914
        %v1916 = vpop.f32.mrb[0].mxu0
        %v1917 = vpop.f32.mrb[0].mxu0
        %v1918 = vadd.f32 %v1757, %v1917
        %v1919 = vpop.f32.mrb[0].mxu0
        %1920 = vmatprep.mubr.bf16.mxu0 %v777
        %1921 = vmatmul.mubr.bf16.gmra.mrb[0].mxu0 %v776
        %v1922 = vpop.f32.mrb[0].mxu0
        %v1923 = vadd.f32 %v1762, %v1922
        %v1924 = vpop.f32.mrb[0].mxu0
        %v1925 = vpop.f32.mrb[0].mxu0
        %v1926 = vadd.f32 %v1765, %v1925
        %v1927 = vpop.f32.mrb[0].mxu0
        %1928 = vmatprep.mubr.bf16.mxu0 %v780
        %1929 = vmatmul.mubr.bf16.gmra.mrb[0].mxu0 %v779
        %v1930 = vpop.f32.mrb[0].mxu0
        %v1931 = vadd.f32 %v1770, %v1930
        %v1932 = vpop.f32.mrb[0].mxu0
        %v1933 = vpop.f32.mrb[0].mxu0
        %v1934 = vadd.f32 %v1773, %v1933
        %v1935 = vpop.f32.mrb[0].mxu0
        %1936 = vmatprep.mubr.bf16.mxu0 %v783
        %1937 = vmatmul.mubr.bf16.gmra.mrb[0].mxu0 %v782
        %v1938 = vpop.f32.mrb[0].mxu0
        %v1939 = vadd.f32 %v1778, %v1938
        %v1940 = vpop.f32.mrb[0].mxu0
        %v1941 = vpop.f32.mrb[0].mxu0
        %v1942 = vadd.f32 %v1781, %v1941
        %v1943 = vpop.f32.mrb[0].mxu0
        %1944 = vmatprep.mubr.bf16.mxu0 %v786
        %1945 = vmatmul.mubr.bf16.gmra.mrb[0].mxu0 %v785
        %v1946 = vpop.f32.mrb[0].mxu0
        %v1947 = vadd.f32 %v1786, %v1946
        %v1948 = vpop.f32.mrb[0].mxu0
        %v1949 = vpop.f32.mrb[0].mxu0
        %v1950 = vadd.f32 %v1789, %v1949
        %v1951 = vpop.f32.mrb[0].mxu0
        %1952 = vmatprep.mubr.bf16.mxu0 %v789
        %1953 = vmatmul.mubr.bf16.gmra.mrb[0].mxu0 %v788
        %v1954 = vpop.f32.mrb[0].mxu0
        %v1955 = vadd.f32 %v1794, %v1954
        %v1956 = vpop.f32.mrb[0].mxu0
        %v1957 = vpop.f32.mrb[0].mxu0
        %v1958 = vadd.f32 %v1797, %v1957
        %v1959 = vpop.f32.mrb[0].mxu0
        %1960 = vmatprep.mubr.bf16.mxu0 %v792
        %1961 = vmatmul.mubr.bf16.gmra.mrb[0].mxu0 %v791
        %v1962 = vpop.f32.mrb[0].mxu0
        %v1963 = vadd.f32 %v1802, %v1962
        %v1964 = vpop.f32.mrb[0].mxu0
        %v1965 = vpop.f32.mrb[0].mxu0
        %v1966 = vadd.f32 %v1805, %v1965
        %v1967 = vpop.f32.mrb[0].mxu0
        %1968 = vmatprep.mubr.bf16.mxu0 %v795
        %1969 = vmatmul.mubr.bf16.gmra.mrb[0].mxu0 %v794
        %v1970 = vpop.f32.mrb[0].mxu0
        %v1971 = vadd.f32 %v1810, %v1970
        %v1972 = vpop.f32.mrb[0].mxu0
        %v1973 = vpop.f32.mrb[0].mxu0
        %v1974 = vadd.f32 %v1813, %v1973
        %v1975 = vpop.f32.mrb[0].mxu0
        %1976 = vmatprep.mubr.bf16.mxu0 %v798
        %1977 = vmatmul.mubr.bf16.gmra.mrb[0].mxu0 %v797
        %v1978 = vpop.f32.mrb[0].mxu0
        %v1979 = vadd.f32 %v1818, %v1978
        %v1980 = vpop.f32.mrb[0].mxu0
        %v1981 = vpop.f32.mrb[0].mxu0
        %v1982 = vadd.f32 %v1821, %v1981
        %v1983 = vpop.f32.mrb[0].mxu0
        %1984 = vmatprep.mubr.bf16.mxu0 %v801
        %1985 = vmatmul.mubr.bf16.gmra.mrb[0].mxu0 %v800
        %v1986 = vpop.f32.mrb[0].mxu0
        %v1987 = vadd.f32 %v1826, %v1986
        %v1988 = vpop.f32.mrb[0].mxu0
        %v1989 = vpop.f32.mrb[0].mxu0
        %v1990 = vadd.f32 %v1829, %v1989
        %v1991 = vpop.f32.mrb[0].mxu0
        %1992 = vmatprep.mubr.bf16.mxu0 %v804
        %1993 = vmatmul.mubr.bf16.gmra.mrb[0].mxu0 %v803
        %v1994 = vpop.f32.mrb[0].mxu0
        %v1995 = vadd.f32 %v1834, %v1994
        %v1996 = vpop.f32.mrb[0].mxu0
        %v1997 = vpop.f32.mrb[0].mxu0
        %v1998 = vadd.f32 %v1837, %v1997
        %v1999 = vpop.f32.mrb[0].mxu0
        %2000 = vmatprep.mubr.bf16.mxu0 %v807
        %2001 = vmatmul.mubr.bf16.gmra.mrb[0].mxu0 %v806
        %v2002 = vpop.f32.mrb[0].mxu0
        %v2003 = vadd.f32 %v1842, %v2002
        %v2004 = vpop.f32.mrb[0].mxu0
        %v2005 = vpop.f32.mrb[0].mxu0
        %v2006 = vadd.f32 %v1845, %v2005
        %v2007 = vpop.f32.mrb[0].mxu0
        %2008 = vmatprep.mubr.bf16.mxu0 %v810
        %2009 = vmatmul.mubr.bf16.gmra.mrb[0].mxu0 %v809
        %v2010 = vpop.f32.mrb[0].mxu0
        %v2011 = vadd.f32 %v1850, %v2010
        %v2012 = vpop.f32.mrb[0].mxu0
        %v2013 = vpop.f32.mrb[0].mxu0
        %v2014 = vadd.f32 %v1853, %v2013
        %v2015 = vpop.f32.mrb[0].mxu0
        %2016 = vmatprep.mubr.bf16.mxu0 %v813
        %2017 = vmatmul.mubr.bf16.gmra.mrb[0].mxu0 %v812
        %v2018 = vpop.f32.mrb[0].mxu0
        %v2019 = vadd.f32 %v1858, %v2018
        %v2020 = vpop.f32.mrb[0].mxu0
        %v2021 = vpop.f32.mrb[0].mxu0
        %v2022 = vadd.f32 %v1861, %v2021
        %v2023 = vpop.f32.mrb[0].mxu0
        %2024 = vmatprep.mubr.bf16.mxu0 %v816
        %2025 = vmatmul.mubr.bf16.gmra.mrb[0].mxu0 %v815
        %v2026 = vpop.f32.mrb[0].mxu0
        %v2027 = vadd.f32 %v1866, %v2026
        %v2028 = vpop.f32.mrb[0].mxu0
        %v2029 = vpop.f32.mrb[0].mxu0
        %v2030 = vadd.f32 %v1869, %v2029
        %v2031 = vpop.f32.mrb[0].mxu0
        %2032 = vmatprep.mubr.bf16.mxu0 %v819
        %2033 = vmatmul.mubr.bf16.gmra.mrb[0].mxu0 %v818
        %v2034 = vpop.f32.mrb[0].mxu0
        %v2035 = vadd.f32 %v1874, %v2034
        %v2036 = vpop.f32.mrb[0].mxu0
        %v2037 = vpop.f32.mrb[0].mxu0
        %v2038 = vadd.f32 %v1877, %v2037
        %v2039 = vpop.f32.mrb[0].mxu0
        %2040 = vdwg.mxu0
        %2041 = vmatprep.subr.bf16.mxu0 0
        %2042 = vmatpush1.bf16.msra.mxu0 %v1317
        %2043 = vmatprep.subr.bf16.mxu0 0
        %2044 = vmatpush1.bf16.msra.mxu0 %v1318
        %2045 = vmatprep.subr.bf16.mxu0 0
        %2046 = vmatpush1.bf16.msra.mxu0 %v1319
        %2047 = vmatprep.subr.bf16.mxu0 0
        %2048 = vmatpush1.bf16.msra.mxu0 %v1320
        %2049 = vmatprep.subr.bf16.mxu0 0
        %2050 = vmatpush1.bf16.msra.mxu0 %v1321
        %2051 = vmatprep.subr.bf16.mxu0 0
        %2052 = vmatpush1.bf16.msra.mxu0 %v1322
        %2053 = vmatprep.subr.bf16.mxu0 0
        %2054 = vmatpush1.bf16.msra.mxu0 %v1323
        %2055 = vmatprep.subr.bf16.mxu0 0
        %2056 = vmatpush1.bf16.msra.mxu0 %v1324
        %2057 = vmatprep.subr.bf16.mxu0 0
        %2058 = vmatpush1.bf16.msra.mxu0 0
        %2059 = vmatprep.subr.bf16.mxu0 0
        %2060 = vmatpush1.bf16.msra.mxu0 0
        %2061 = vmatprep.subr.bf16.mxu0 0
        %2062 = vmatpush1.bf16.msra.mxu0 0
        %2063 = vmatprep.subr.bf16.mxu0 0
        %2064 = vmatpush1.bf16.msra.mxu0 0
        %2065 = vmatprep.subr.bf16.mxu0 0
        %2066 = vmatpush1.bf16.msra.mxu0 0
        %2067 = vmatprep.subr.bf16.mxu0 0
        %2068 = vmatpush1.bf16.msra.mxu0 0
        %2069 = vmatprep.subr.bf16.mxu0 0
        %2070 = vmatpush1.bf16.msra.mxu0 0
        %2071 = vmatprep.subr.bf16.mxu0 0
        %2072 = vmatpush1.bf16.msra.mxu0 0
        %2073 = vmatprep.mubr.bf16.mxu0 0
        %2074 = vmatmul.mubr.bf16.gmra.mrb[0].mxu0 %v775
        %v2075 = vpop.f32.mrb[0].mxu0
        %v2076 = vadd.f32 %v1915, %v2075
        %v2077 = vpop.f32.mrb[0].mxu0
        %v2078 = vpop.f32.mrb[0].mxu0
        %v2079 = vadd.f32 %v1918, %v2078
        %v2080 = vpop.f32.mrb[0].mxu0
        %2081 = vmatprep.mubr.bf16.mxu0 0
        %2082 = vmatmul.mubr.bf16.gmra.mrb[0].mxu0 %v778
        %v2083 = vpop.f32.mrb[0].mxu0
        %v2084 = vadd.f32 %v1923, %v2083
        %v2085 = vpop.f32.mrb[0].mxu0
        %v2086 = vpop.f32.mrb[0].mxu0
        %v2087 = vadd.f32 %v1926, %v2086
        %v2088 = vpop.f32.mrb[0].mxu0
        %2089 = vmatprep.mubr.bf16.mxu0 0
        %2090 = vmatmul.mubr.bf16.gmra.mrb[0].mxu0 %v781
        %v2091 = vpop.f32.mrb[0].mxu0
        %v2092 = vadd.f32 %v1931, %v2091
        %v2093 = vpop.f32.mrb[0].mxu0
        %v2094 = vpop.f32.mrb[0].mxu0
        %v2095 = vadd.f32 %v1934, %v2094
        %v2096 = vpop.f32.mrb[0].mxu0
        %2097 = vmatprep.mubr.bf16.mxu0 0
        %2098 = vmatmul.mubr.bf16.gmra.mrb[0].mxu0 %v784
        %v2099 = vpop.f32.mrb[0].mxu0
        %v2100 = vadd.f32 %v1939, %v2099
        %v2101 = vpop.f32.mrb[0].mxu0
        %v2102 = vpop.f32.mrb[0].mxu0
        %v2103 = vadd.f32 %v1942, %v2102
        %v2104 = vpop.f32.mrb[0].mxu0
        %2105 = vmatprep.mubr.bf16.mxu0 0
        %2106 = vmatmul.mubr.bf16.gmra.mrb[0].mxu0 %v787
        %v2107 = vpop.f32.mrb[0].mxu0
        %v2108 = vadd.f32 %v1947, %v2107
        %v2109 = vpop.f32.mrb[0].mxu0
        %v2110 = vpop.f32.mrb[0].mxu0
        %v2111 = vadd.f32 %v1950, %v2110
        %v2112 = vpop.f32.mrb[0].mxu0
        %2113 = vmatprep.mubr.bf16.mxu0 0
        %2114 = vmatmul.mubr.bf16.gmra.mrb[0].mxu0 %v790
        %v2115 = vpop.f32.mrb[0].mxu0
        %v2116 = vadd.f32 %v1955, %v2115
        %v2117 = vpop.f32.mrb[0].mxu0
        %v2118 = vpop.f32.mrb[0].mxu0
        %v2119 = vadd.f32 %v1958, %v2118
        %v2120 = vpop.f32.mrb[0].mxu0
        %2121 = vmatprep.mubr.bf16.mxu0 0
        %2122 = vmatmul.mubr.bf16.gmra.mrb[0].mxu0 %v793
        %v2123 = vpop.f32.mrb[0].mxu0
        %v2124 = vadd.f32 %v1963, %v2123
        %v2125 = vpop.f32.mrb[0].mxu0
        %v2126 = vpop.f32.mrb[0].mxu0
        %v2127 = vadd.f32 %v1966, %v2126
        %v2128 = vpop.f32.mrb[0].mxu0
        %2129 = vmatprep.mubr.bf16.mxu0 0
        %2130 = vmatmul.mubr.bf16.gmra.mrb[0].mxu0 %v796
        %v2131 = vpop.f32.mrb[0].mxu0
        %v2132 = vadd.f32 %v1971, %v2131
        %v2133 = vpop.f32.mrb[0].mxu0
        %v2134 = vpop.f32.mrb[0].mxu0
        %v2135 = vadd.f32 %v1974, %v2134
        %v2136 = vpop.f32.mrb[0].mxu0
        %2137 = vmatprep.mubr.bf16.mxu0 0
        %2138 = vmatmul.mubr.bf16.gmra.mrb[0].mxu0 %v799
        %v2139 = vpop.f32.mrb[0].mxu0
        %v2140 = vadd.f32 %v1979, %v2139
        %v2141 = vpop.f32.mrb[0].mxu0
        %v2142 = vpop.f32.mrb[0].mxu0
        %v2143 = vadd.f32 %v1982, %v2142
        %v2144 = vpop.f32.mrb[0].mxu0
        %2145 = vmatprep.mubr.bf16.mxu0 0
        %2146 = vmatmul.mubr.bf16.gmra.mrb[0].mxu0 %v802
        %v2147 = vpop.f32.mrb[0].mxu0
        %v2148 = vadd.f32 %v1987, %v2147
        %v2149 = vpop.f32.mrb[0].mxu0
        %v2150 = vpop.f32.mrb[0].mxu0
        %v2151 = vadd.f32 %v1990, %v2150
        %v2152 = vpop.f32.mrb[0].mxu0
        %2153 = vmatprep.mubr.bf16.mxu0 0
        %2154 = vmatmul.mubr.bf16.gmra.mrb[0].mxu0 %v805
        %v2155 = vpop.f32.mrb[0].mxu0
        %v2156 = vadd.f32 %v1995, %v2155
        %v2157 = vpop.f32.mrb[0].mxu0
        %v2158 = vpop.f32.mrb[0].mxu0
        %v2159 = vadd.f32 %v1998, %v2158
        %v2160 = vpop.f32.mrb[0].mxu0
        %2161 = vmatprep.mubr.bf16.mxu0 0
        %2162 = vmatmul.mubr.bf16.gmra.mrb[0].mxu0 %v808
        %v2163 = vpop.f32.mrb[0].mxu0
        %v2164 = vadd.f32 %v2003, %v2163
        %v2165 = vpop.f32.mrb[0].mxu0
        %v2166 = vpop.f32.mrb[0].mxu0
        %v2167 = vadd.f32 %v2006, %v2166
        %v2168 = vpop.f32.mrb[0].mxu0
        %2169 = vmatprep.mubr.bf16.mxu0 0
        %2170 = vmatmul.mubr.bf16.gmra.mrb[0].mxu0 %v811
        %v2171 = vpop.f32.mrb[0].mxu0
        %v2172 = vadd.f32 %v2011, %v2171
        %v2173 = vpop.f32.mrb[0].mxu0
        %v2174 = vpop.f32.mrb[0].mxu0
        %v2175 = vadd.f32 %v2014, %v2174
        %v2176 = vpop.f32.mrb[0].mxu0
        %2177 = vmatprep.mubr.bf16.mxu0 0
        %2178 = vmatmul.mubr.bf16.gmra.mrb[0].mxu0 %v814
        %v2179 = vpop.f32.mrb[0].mxu0
        %v2180 = vadd.f32 %v2019, %v2179
        %v2181 = vpop.f32.mrb[0].mxu0
        %v2182 = vpop.f32.mrb[0].mxu0
        %v2183 = vadd.f32 %v2022, %v2182
        %v2184 = vpop.f32.mrb[0].mxu0
        %2185 = vmatprep.mubr.bf16.mxu0 0
        %2186 = vmatmul.mubr.bf16.gmra.mrb[0].mxu0 %v817
        %v2187 = vpop.f32.mrb[0].mxu0
        %v2188 = vadd.f32 %v2027, %v2187
        %v2189 = vpop.f32.mrb[0].mxu0
        %v2190 = vpop.f32.mrb[0].mxu0
        %v2191 = vadd.f32 %v2030, %v2190
        %v2192 = vpop.f32.mrb[0].mxu0
        %2193 = vmatprep.mubr.bf16.mxu0 0
        %2194 = vmatmul.mubr.bf16.gmra.mrb[0].mxu0 %v820
        %v2195 = vpop.f32.mrb[0].mxu0
        %v2196 = vadd.f32 %v2035, %v2195
        %v2197 = vpop.f32.mrb[0].mxu0
        %v2198 = vpop.f32.mrb[0].mxu0
        %v2199 = vadd.f32 %v2038, %v2198
        %v2200 = vpop.f32.mrb[0].mxu0
        %2201 = vdwg.mxu0
        %2202 = vst [vmem:[%s261] sm:$0xff] %v2076
        %2203 = vst [vmem:[%s261 + $0x8] sm:$0xff] %v2079
        %2204 = vst [vmem:[%s261 + $0x10] sm:$0xff] %v2084
        %2205 = vst [vmem:[%s261 + $0x18] sm:$0xff] %v2087
        %2206 = vst [vmem:[%s261 + $0x20] sm:$0xff] %v2092
        %2207 = vst [vmem:[%s261 + $0x28] sm:$0xff] %v2095
        %2208 = vst [vmem:[%s261 + $0x30] sm:$0xff] %v2100
        %2209 = vst [vmem:[%s261 + $0x38] sm:$0xff] %v2103
        %2210 = vst [vmem:[%s261 + $0x40] sm:$0xff] %v2108
        %2211 = vst [vmem:[%s261 + $0x48] sm:$0xff] %v2111
        %2212 = vst [vmem:[%s261 + $0x50] sm:$0xff] %v2116
        %2213 = vst [vmem:[%s261 + $0x58] sm:$0xff] %v2119
        %2214 = vst [vmem:[%s261 + $0x60] sm:$0xff] %v2124
        %2215 = vst [vmem:[%s261 + $0x68] sm:$0xff] %v2127
        %2216 = vst [vmem:[%s261 + $0x70] sm:$0xff] %v2132
        %2217 = vst [vmem:[%s261 + $0x78] sm:$0xff] %v2135
        %2218 = vst [vmem:[%s261 + $0x80] sm:$0xff] %v2140
        %2219 = vst [vmem:[%s261 + $0x88] sm:$0xff] %v2143
        %2220 = vst [vmem:[%s261 + $0x90] sm:$0xff] %v2148
        %2221 = vst [vmem:[%s261 + $0x98] sm:$0xff] %v2151
        %2222 = vst [vmem:[%s261 + $0xa0] sm:$0xff] %v2156
        %2223 = vst [vmem:[%s261 + $0xa8] sm:$0xff] %v2159
        %2224 = vst [vmem:[%s261 + $0xb0] sm:$0xff] %v2164
        %2225 = vst [vmem:[%s261 + $0xb8] sm:$0xff] %v2167
        %2226 = vst [vmem:[%s261 + $0xc0] sm:$0xff] %v2172
        %2227 = vst [vmem:[%s261 + $0xc8] sm:$0xff] %v2175
        %2228 = vst [vmem:[%s261 + $0xd0] sm:$0xff] %v2180
        %2229 = vst [vmem:[%s261 + $0xd8] sm:$0xff] %v2183
        %2230 = vst [vmem:[%s261 + $0xe0] sm:$0xff] %v2188
        %2231 = vst [vmem:[%s261 + $0xe8] sm:$0xff] %v2191
        %2232 = vst [vmem:[%s261 + $0xf0] sm:$0xff] %v2196
        %2233 = vst [vmem:[%s261 + $0xf8] sm:$0xff] %v2199
        %v2234 = vadd.f32 %v2076, %v2079
        %v2235 = vadd.f32 %v2234, %v2084
        %v2236 = vadd.f32 %v2235, %v2087
        %v2237 = vadd.f32 %v2236, %v2092
        %v2238 = vadd.f32 %v2237, %v2095
        %v2239 = vadd.f32 %v2238, %v2100
        %v2240 = vadd.f32 %v2239, %v2103
        %v2241 = vadd.f32 %v2240, %v2108
        %v2242 = vadd.f32 %v2241, %v2111
        %v2243 = vadd.f32 %v2242, %v2116
        %v2244 = vadd.f32 %v2243, %v2119
        %v2245 = vadd.f32 %v2244, %v2124
        %v2246 = vadd.f32 %v2245, %v2127
        %v2247 = vadd.f32 %v2246, %v2132
        %v2248 = vadd.f32 %v2247, %v2135
        %v2249 = vadd.f32 %v2248, %v2140
        %v2250 = vadd.f32 %v2249, %v2143
        %v2251 = vadd.f32 %v2250, %v2148
        %v2252 = vadd.f32 %v2251, %v2151
        %v2253 = vadd.f32 %v2252, %v2156
        %v2254 = vadd.f32 %v2253, %v2159
        %v2255 = vadd.f32 %v2254, %v2164
        %v2256 = vadd.f32 %v2255, %v2167
        %v2257 = vadd.f32 %v2256, %v2172
        %v2258 = vadd.f32 %v2257, %v2175
        %v2259 = vadd.f32 %v2258, %v2180
        %v2260 = vadd.f32 %v2259, %v2183
        %v2261 = vadd.f32 %v2260, %v2188
        %v2262 = vadd.f32 %v2261, %v2191
        %v2263 = vadd.f32 %v2262, %v2196
        %v2264 = vadd.f32 %v2263, %v2199
        %v2265 = vrot.slane %v2264, 4
        %v2266 = vadd.f32 %v2264, %v2265
        %v2267 = vrot.slane %v2266, 2
        %v2268 = vadd.f32 %v2266, %v2267
        %v2269 = vrot.slane %v2268, 1
        %v2270 = vadd.f32 %v2268, %v2269
        %v2271 = vmul.f32 %v2076, %v2076
        %v2272 = vmul.f32 %v2079, %v2079
        %v2273 = vmul.f32 %v2084, %v2084
        %v2274 = vmul.f32 %v2087, %v2087
        %v2275 = vmul.f32 %v2092, %v2092
        %v2276 = vmul.f32 %v2095, %v2095
        %v2277 = vmul.f32 %v2100, %v2100
        %v2278 = vmul.f32 %v2103, %v2103
        %v2279 = vmul.f32 %v2108, %v2108
        %v2280 = vmul.f32 %v2111, %v2111
        %v2281 = vmul.f32 %v2116, %v2116
        %v2282 = vmul.f32 %v2119, %v2119
        %v2283 = vmul.f32 %v2124, %v2124
        %v2284 = vmul.f32 %v2127, %v2127
        %v2285 = vmul.f32 %v2132, %v2132
        %v2286 = vmul.f32 %v2135, %v2135
        %v2287 = vmul.f32 %v2140, %v2140
        %v2288 = vmul.f32 %v2143, %v2143
        %v2289 = vmul.f32 %v2148, %v2148
        %v2290 = vmul.f32 %v2151, %v2151
        %v2291 = vmul.f32 %v2156, %v2156
        %v2292 = vmul.f32 %v2159, %v2159
        %v2293 = vmul.f32 %v2164, %v2164
        %v2294 = vmul.f32 %v2167, %v2167
        %v2295 = vmul.f32 %v2172, %v2172
        %v2296 = vmul.f32 %v2175, %v2175
        %v2297 = vmul.f32 %v2180, %v2180
        %v2298 = vmul.f32 %v2183, %v2183
        %v2299 = vmul.f32 %v2188, %v2188
        %v2300 = vmul.f32 %v2191, %v2191
        %v2301 = vmul.f32 %v2196, %v2196
        %v2302 = vmul.f32 %v2199, %v2199
        %v2303 = vadd.f32 %v2271, %v2272
        %v2304 = vadd.f32 %v2303, %v2273
        %v2305 = vadd.f32 %v2304, %v2274
        %v2306 = vadd.f32 %v2305, %v2275
        %v2307 = vadd.f32 %v2306, %v2276
        %v2308 = vadd.f32 %v2307, %v2277
        %v2309 = vadd.f32 %v2308, %v2278
        %v2310 = vadd.f32 %v2309, %v2279
        %v2311 = vadd.f32 %v2310, %v2280
        %v2312 = vadd.f32 %v2311, %v2281
        %v2313 = vadd.f32 %v2312, %v2282
        %v2314 = vadd.f32 %v2313, %v2283
        %v2315 = vadd.f32 %v2314, %v2284
        %v2316 = vadd.f32 %v2315, %v2285
        %v2317 = vadd.f32 %v2316, %v2286
        %v2318 = vadd.f32 %v2317, %v2287
        %v2319 = vadd.f32 %v2318, %v2288
        %v2320 = vadd.f32 %v2319, %v2289
        %v2321 = vadd.f32 %v2320, %v2290
        %v2322 = vadd.f32 %v2321, %v2291
        %v2323 = vadd.f32 %v2322, %v2292
        %v2324 = vadd.f32 %v2323, %v2293
        %v2325 = vadd.f32 %v2324, %v2294
        %v2326 = vadd.f32 %v2325, %v2295
        %v2327 = vadd.f32 %v2326, %v2296
        %v2328 = vadd.f32 %v2327, %v2297
        %v2329 = vadd.f32 %v2328, %v2298
        %v2330 = vadd.f32 %v2329, %v2299
        %v2331 = vadd.f32 %v2330, %v2300
        %v2332 = vadd.f32 %v2331, %v2301
        %v2333 = vadd.f32 %v2332, %v2302
        %v2334 = vrot.slane %v2333, 4
        %v2335 = vadd.f32 %v2333, %v2334
        %v2336 = vrot.slane %v2335, 2
        %v2337 = vadd.f32 %v2335, %v2336
        %v2338 = vrot.slane %v2337, 1
        %v2339 = vadd.f32 %v2337, %v2338
        %v2340 = vsel %vm401, %v2270, %v2339
        %2341 = vst [vmem:[%s268] sm:$0x3] %v2340
        %s2342 = sand.u32 %s124, 1
        %s2343 = scalar_lea.sflag [#allocation4], %s2342
        %s2344 = sand.u32 %s124, 1
        %s2345 = smul.addr %s2344, 256
        %s2346 = scalar_lea.vmem [#allocation7], %s2345
        %s2347 = sand.u32 %s150, 1
        %s2348 = scalar_lea.sflag [#allocation9], %s2347
        %s2349 = sand.u32 %s150, 1
        %s2350 = smul.addr %s2349, 2
        %s2351 = scalar_lea.vmem [#allocation8], %s2350
        // Predicated region
        $region45: #{tpu_custom_call.1} parent=35 // pred_check
          %p2352 = pneg %p134
        $region46: #{tpu_custom_call.1} parent=35 // pred_check_branch
          %2354 = sbr.rel (%p2352) target = $region48
        $region47: #{tpu_custom_call.1} parent=35 // pred_region
          %s2356 = ssub.s32 4096, 4096
          %2357 = vsyncadd %s2343, %s2356
          %s2358 = smul.addr %s27, 32
          %s2359 = smul.addr %s2358, 128
          %s2360 = scalar_lea.hbm %s4, %s2359
          %s2361 = sshll.u32 %s2346, 4
          %s2362 = int_to_ptr.vmem [resolvable:$true] %s2361
          %2367 = dma.vmem_to_hbm [thread:$0]  %s2362, 4096, %s2360, %s2343, 128, 128, 8
        $region48: #{tpu_custom_call.1} parent=35 // pred_fallthru
          _
        // Predicated region
        $region49: #{tpu_custom_call.1} parent=35 // pred_check
          %p2368 = pneg %p160
        $region50: #{tpu_custom_call.1} parent=35 // pred_check_branch
          %2370 = sbr.rel (%p2368) target = $region52
        $region51: #{tpu_custom_call.1} parent=35 // pred_region
          %s2372 = ssub.s32 32, 32
          %2373 = vsyncadd %s2348, %s2372
          %s2374 = smul.addr %s27, 32
          %s2375 = scalar_lea.hbm %s5, %s2374
          %s2377 = sshll.u32 %s2351, 4
          %s2378 = int_to_ptr.vmem [resolvable:$true] %s2377
          %2380 = dma.vmem_to_hbm [thread:$0]  %s2378, 32, %s2375, %s2348
        $region52: #{tpu_custom_call.1} parent=35 // pred_fallthru
          _
      $region36: #{tpu_custom_call.1} parent=5 // pred_fallthru
        _
      %p2381 = scmp.le.s32.totalorder 2, %s22
      // Predicated region
      $region53: #{tpu_custom_call.1} parent=5 // pred_check
        %p2382 = pneg %p2381
      $region54: #{tpu_custom_call.1} parent=5 // pred_check_branch
        %2384 = sbr.rel (%p2382) target = $region56
      $region55: #{tpu_custom_call.1} parent=5 // pred_region
        %s2385 = ssub.s32 %s22, 2
        // Predicated region
        $region57: #{tpu_custom_call.1} parent=55 // pred_check
          %p2386 = pneg %p140
        $region58: #{tpu_custom_call.1} parent=55 // pred_check_branch
          %2388 = sbr.rel (%p2386) target = $region60
        $region59: #{tpu_custom_call.1} parent=55 // pred_region
          %s2389 = sand.u32 %s125, 1
          %s2390 = scalar_lea.sflag [#allocation4], %s2389
          %s2391 = sand.u32 %s125, 1
          %s2392 = smul.addr %s2391, 256
          %s2393 = scalar_lea.vmem [#allocation7], %s2392
          %2394 = dma.done %s2390, 4096
        $region60: #{tpu_custom_call.1} parent=55 // pred_fallthru
          _
        // Predicated region
        $region61: #{tpu_custom_call.1} parent=55 // pred_check
          %p2395 = pneg %p166
        $region62: #{tpu_custom_call.1} parent=55 // pred_check_branch
          %2397 = sbr.rel (%p2395) target = $region64
        $region63: #{tpu_custom_call.1} parent=55 // pred_region
          %s2398 = sand.u32 %s151, 1
          %s2399 = scalar_lea.sflag [#allocation9], %s2398
          %s2400 = sand.u32 %s151, 1
          %s2401 = smul.addr %s2400, 2
          %s2402 = scalar_lea.vmem [#allocation8], %s2401
          %2403 = dma.done %s2399, 32
        $region64: #{tpu_custom_call.1} parent=55 // pred_fallthru
          _
      $region56: #{tpu_custom_call.1} parent=5 // pred_fallthru
        _
    $region6: #{tpu_custom_call.1} parent=1 // loop_footer
      %s26 = sadd.s32 1, %s22
    $region7: #{tpu_custom_call.1} parent=1 // loop_footer_branch
      %21 = sbr.rel target = $region3
    $region8: #{tpu_custom_call.1} parent=1 // loop_exit
      _
    %2404 = vsyncpa [#allocation3], 1
    %s2405 = scalar_lea.sflag [#allocation3], 1
    %2406 = vsyncpa %s2405, 1
    %2407 = vsyncpa [#allocation6], 1
    %2408 = vsyncpa [#allocation4], 1
    %s2409 = scalar_lea.sflag [#allocation4], 1
    %2410 = vsyncpa %s2409, 1
    %2411 = vsyncpa [#allocation9], 1
    %s2412 = scalar_lea.sflag [#allocation9], 1
    %2413 = vsyncpa %s2412, 1

</llo_original>
